<compile_context>
chip_gen: v5e
topology: v5e:2x2
jax: 0.10.0
libtpu: 0.0.40
codegen_flags: <defaults>
</compile_context>

<pallas_src>
import jax
import jax.numpy as jnp
from jax.experimental import pallas as pl
from jax.experimental.pallas import tpu as pltpu

IN_DIM = 1 * 28 * 28        # 784
IN_PAD = 896                # 7 * 128 (lane-aligned contraction for layer 1)
H1 = 128
H2 = 64
OUT_DIM = 3
OUT_PAD = 128               # lane-dense padded output width


def mlp_kernel(x_ref, w1_ref, b1_ref, w2_ref, b2_ref, w3_ref, b3_ref, o_ref):
    # x_ref: (TB, 896) bf16 tile of the (padded) batch.
    # Weights bf16, biases f32, full arrays resident in VMEM.
    x = x_ref[...]
    h1 = jnp.dot(x, w1_ref[...], preferred_element_type=jnp.float32) + b1_ref[...]
    h1 = jnp.maximum(h1, 0.0).astype(jnp.bfloat16)
    h2 = jnp.dot(h1, w2_ref[...], preferred_element_type=jnp.float32) + b2_ref[...]
    h2 = jnp.maximum(h2, 0.0).astype(jnp.bfloat16)
    y = jnp.dot(h2, w3_ref[...], preferred_element_type=jnp.float32) + b3_ref[...]
    o_ref[...] = y.astype(o_ref.dtype)


def prepare_params(params, dtype=jnp.bfloat16):
    """One-time weight prep: transpose to (in, out), pad K/out dims, cast to bf16."""
    w1, b1, w2, b2, w3, b3 = params
    w1t = jnp.zeros((IN_PAD, H1), jnp.float32).at[:IN_DIM, :].set(w1.T).astype(dtype)
    w2t = w2.T.astype(dtype)
    w3t = jnp.zeros((H2, OUT_PAD), jnp.float32).at[:, :OUT_DIM].set(w3.T).astype(dtype)
    b1r = b1.reshape(1, H1).astype(jnp.float32)
    b2r = b2.reshape(1, H2).astype(jnp.float32)
    b3r = jnp.zeros((1, OUT_PAD), jnp.float32).at[:, :OUT_DIM].set(b3)
    return (w1t, b1r, w2t, b2r, w3t, b3r)


def three_way_net(x, prepped, *, tile_b=256):
    """x: (B, 1, 28, 28) float32 (NCHW). Returns logits (B, 3) float32.

    tile_b: batch tile (multiple of 256 recommended; batch is zero-padded to a
    tile multiple, so any B is accepted).
    """
    w1t, b1r, w2t, b2r, w3t, b3r = prepped
    B = x.shape[0]
    B_pad = ((B + tile_b - 1) // tile_b) * tile_b

    # torch.flatten(x, 1), then zero-pad batch -> B_pad and K 784 -> 896, bf16 stream.
    x2 = x.reshape(B, -1)
    xp = jnp.zeros((B_pad, IN_PAD), jnp.bfloat16)
    xp = xp.at[:B, :IN_DIM].set(x2.astype(jnp.bfloat16))

    grid = (B_pad // tile_b,)
    full = lambda shape: pl.BlockSpec(shape, lambda i: (0, 0))

    flops = 2 * B_pad * (IN_PAD * H1 + H1 * H2 + H2 * OUT_PAD)
    bytes_accessed = (
        xp.size * xp.dtype.itemsize
        + sum(a.size * a.dtype.itemsize for a in (w1t, b1r, w2t, b2r, w3t, b3r))
        + B_pad * OUT_PAD * 4
    )

    out = pl.pallas_call(
        mlp_kernel,
        out_shape=jax.ShapeDtypeStruct((B_pad, OUT_PAD), jnp.float32),
        grid_spec=pltpu.PrefetchScalarGridSpec(
            num_scalar_prefetch=0,
            grid=grid,
            in_specs=[
                pl.BlockSpec((tile_b, IN_PAD), lambda i: (i, 0)),  # x tile
                full((IN_PAD, H1)),    # w1^T (padded K)
                full((1, H1)),         # b1
                full((H1, H2)),        # w2^T
                full((1, H2)),         # b2
                full((H2, OUT_PAD)),   # w3^T (padded out)
                full((1, OUT_PAD)),    # b3 (padded out)
            ],
            out_specs=pl.BlockSpec((tile_b, OUT_PAD), lambda i: (i, 0)),
        ),
        compiler_params=pltpu.CompilerParams(
            dimension_semantics=("parallel",)),
        cost_estimate=pl.CostEstimate(
            flops=flops, transcendentals=0, bytes_accessed=bytes_accessed),
    )(xp, w1t, b1r, w2t, b2r, w3t, b3r)

    # Strip batch padding and the lane-padding of the 3-wide output.
    return out[:B, :OUT_DIM]


def init_params(key):
    """Deterministic init mimicking nn.Linear's U(-1/sqrt(fan_in), 1/sqrt(fan_in))."""
    ks = jax.random.split(key, 6)

    def linear(kw, kb, out_f, in_f):
        bound = 1.0 / jnp.sqrt(in_f)
        w = jax.random.uniform(kw, (out_f, in_f), jnp.float32, -bound, bound)
        b = jax.random.uniform(kb, (out_f,), jnp.float32, -bound, bound)
        return w, b

    w1, b1 = linear(ks[0], ks[1], H1, IN_DIM)
    w2, b2 = linear(ks[2], ks[3], H2, H1)
    w3, b3 = linear(ks[4], ks[5], OUT_DIM, H2)
    return (w1, b1, w2, b2, w3, b3)


def reference(x, params):
    w1, b1, w2, b2, w3, b3 = params
    h = x.reshape(x.shape[0], -1)
    h = jnp.maximum(h @ w1.T + b1, 0.0)
    h = jnp.maximum(h @ w2.T + b2, 0.0)
    return h @ w3.T + b3


if __name__ == "__main__":
    key = jax.random.PRNGKey(0)
    k_x, k_p = jax.random.split(key)

    B = 8
    x = jax.random.normal(k_x, (B, 1, 28, 28), jnp.float32)  # NCHW
    params = init_params(k_p)
    prepped = prepare_params(params)   # one-time weight transpose/pad/cast

    out = three_way_net(x, prepped, tile_b=256)
    out = jax.block_until_ready(out)

    ref = reference(x, params)
    assert out.shape == (B, OUT_DIM)
    # Tolerance relaxed vs f32 reference because x/weights are streamed in bf16.
    max_err = float(jnp.max(jnp.abs(out - ref)))
    assert jnp.allclose(out, ref, atol=5e-2, rtol=5e-2), (
        f"mismatch vs reference (max abs err {max_err})")

    print("KERNEL_OK")
</pallas_src>

<mosaic_0001>
module attributes {stable_mosaic.version = 11 : i64} {
  func.func @mlp_kernel(%arg0: i32, %arg1: memref<256x896xbf16, #tpu.memory_space<vmem>>, %arg2: memref<896x128xbf16, #tpu.memory_space<vmem>>, %arg3: memref<1x128xf32, #tpu.memory_space<vmem>>, %arg4: memref<128x64xbf16, #tpu.memory_space<vmem>>, %arg5: memref<1x64xf32, #tpu.memory_space<vmem>>, %arg6: memref<64x128xbf16, #tpu.memory_space<vmem>>, %arg7: memref<1x128xf32, #tpu.memory_space<vmem>>, %arg8: memref<256x128xf32, #tpu.memory_space<vmem>>) attributes {dimension_semantics = [#tpu.dimension_semantics<parallel>], iteration_bounds = array<i64: 1>, scalar_prefetch = 0 : i64, scratch_operands = 0 : i64, tpu.core_type = #tpu.core_type<tc>, window_params = [{transform_indices = @transform_0, window_bounds = array<i64: 256, 896>}, {pipeline_mode = #tpu.pipeline_mode<synchronous>, transform_indices = @transform_1, window_bounds = array<i64: 896, 128>}, {pipeline_mode = #tpu.pipeline_mode<synchronous>, transform_indices = @transform_2, window_bounds = array<i64: 1, 128>}, {pipeline_mode = #tpu.pipeline_mode<synchronous>, transform_indices = @transform_3, window_bounds = array<i64: 128, 64>}, {pipeline_mode = #tpu.pipeline_mode<synchronous>, transform_indices = @transform_4, window_bounds = array<i64: 1, 64>}, {pipeline_mode = #tpu.pipeline_mode<synchronous>, transform_indices = @transform_5, window_bounds = array<i64: 64, 128>}, {pipeline_mode = #tpu.pipeline_mode<synchronous>, transform_indices = @transform_6, window_bounds = array<i64: 1, 128>}, {transform_indices = @transform_7, window_bounds = array<i64: 256, 128>}]} {
    %c0 = arith.constant 0 : index
    %c0_0 = arith.constant 0 : index
    %0 = vector.load %arg1[%c0, %c0_0] : memref<256x896xbf16, #tpu.memory_space<vmem>>, vector<256x896xbf16>
    %c0_1 = arith.constant 0 : index
    %c0_2 = arith.constant 0 : index
    %1 = vector.load %arg2[%c0_1, %c0_2] : memref<896x128xbf16, #tpu.memory_space<vmem>>, vector<896x128xbf16>
    %cst = arith.constant dense<0.000000e+00> : vector<256x128xf32>
    %2 = tpu.matmul %0, %1, %cst {dimension_numbers = #tpu.dot_dimension_numbers<[1], [0], [0], [1], [0, 0, 1, 1], [], []>} : vector<256x896xbf16>, vector<896x128xbf16>, vector<256x128xf32> -> vector<256x128xf32>
    %c0_3 = arith.constant 0 : index
    %c0_4 = arith.constant 0 : index
    %3 = vector.load %arg3[%c0_3, %c0_4] : memref<1x128xf32, #tpu.memory_space<vmem>>, vector<1x128xf32>
    %4 = vector.broadcast %3 : vector<1x128xf32> to vector<256x128xf32>
    %5 = arith.addf %2, %4 : vector<256x128xf32>
    %cst_5 = arith.constant 0.000000e+00 : f32
    %6 = vector.broadcast %cst_5 : f32 to vector<256x128xf32>
    %7 = arith.maximumf %5, %6 : vector<256x128xf32>
    %8 = arith.truncf %7 : vector<256x128xf32> to vector<256x128xbf16>
    %c0_6 = arith.constant 0 : index
    %c0_7 = arith.constant 0 : index
    %9 = vector.load %arg4[%c0_6, %c0_7] : memref<128x64xbf16, #tpu.memory_space<vmem>>, vector<128x64xbf16>
    %cst_8 = arith.constant dense<0.000000e+00> : vector<256x64xf32>
    %10 = tpu.matmul %8, %9, %cst_8 {dimension_numbers = #tpu.dot_dimension_numbers<[1], [0], [0], [1], [0, 0, 1, 1], [], []>} : vector<256x128xbf16>, vector<128x64xbf16>, vector<256x64xf32> -> vector<256x64xf32>
    %c0_9 = arith.constant 0 : index
    %c0_10 = arith.constant 0 : index
    %11 = vector.load %arg5[%c0_9, %c0_10] : memref<1x64xf32, #tpu.memory_space<vmem>>, vector<1x64xf32>
    %12 = vector.broadcast %11 : vector<1x64xf32> to vector<256x64xf32>
    %13 = arith.addf %10, %12 : vector<256x64xf32>
    %cst_11 = arith.constant 0.000000e+00 : f32
    %14 = vector.broadcast %cst_11 : f32 to vector<256x64xf32>
    %15 = arith.maximumf %13, %14 : vector<256x64xf32>
    %16 = arith.truncf %15 : vector<256x64xf32> to vector<256x64xbf16>
    %c0_12 = arith.constant 0 : index
    %c0_13 = arith.constant 0 : index
    %17 = vector.load %arg6[%c0_12, %c0_13] : memref<64x128xbf16, #tpu.memory_space<vmem>>, vector<64x128xbf16>
    %cst_14 = arith.constant dense<0.000000e+00> : vector<256x128xf32>
    %18 = tpu.matmul %16, %17, %cst_14 {dimension_numbers = #tpu.dot_dimension_numbers<[1], [0], [0], [1], [0, 0, 1, 1], [], []>} : vector<256x64xbf16>, vector<64x128xbf16>, vector<256x128xf32> -> vector<256x128xf32>
    %c0_15 = arith.constant 0 : index
    %c0_16 = arith.constant 0 : index
    %19 = vector.load %arg7[%c0_15, %c0_16] : memref<1x128xf32, #tpu.memory_space<vmem>>, vector<1x128xf32>
    %20 = vector.broadcast %19 : vector<1x128xf32> to vector<256x128xf32>
    %21 = arith.addf %18, %20 : vector<256x128xf32>
    %c0_17 = arith.constant 0 : index
    %c0_18 = arith.constant 0 : index
    %22 = vector.load %arg8[%c0_17, %c0_18] : memref<256x128xf32, #tpu.memory_space<vmem>>, vector<256x128xf32>
    tpu.vector_store %arg8[%c0_17, %c0_18], %21 {strides = array<i32>} : memref<256x128xf32, #tpu.memory_space<vmem>>, vector<256x128xf32>,
    return
  }
  func.func @transform_0(%arg0: i32) -> (i32, i32) {
    %c0_i32 = arith.constant 0 : i32
    %c0_i32_0 = arith.constant 0 : i32
    return %arg0, %c0_i32 : i32, i32
  }
  func.func @transform_1(%arg0: i32) -> (i32, i32) {
    %c0_i32 = arith.constant 0 : i32
    %c0_i32_0 = arith.constant 0 : i32
    %c0_i32_1 = arith.constant 0 : i32
    return %c0_i32, %c0_i32_0 : i32, i32
  }
  func.func @transform_2(%arg0: i32) -> (i32, i32) {
    %c0_i32 = arith.constant 0 : i32
    %c0_i32_0 = arith.constant 0 : i32
    %c0_i32_1 = arith.constant 0 : i32
    return %c0_i32, %c0_i32_0 : i32, i32
  }
  func.func @transform_3(%arg0: i32) -> (i32, i32) {
    %c0_i32 = arith.constant 0 : i32
    %c0_i32_0 = arith.constant 0 : i32
    %c0_i32_1 = arith.constant 0 : i32
    return %c0_i32, %c0_i32_0 : i32, i32
  }
  func.func @transform_4(%arg0: i32) -> (i32, i32) {
    %c0_i32 = arith.constant 0 : i32
    %c0_i32_0 = arith.constant 0 : i32
    %c0_i32_1 = arith.constant 0 : i32
    return %c0_i32, %c0_i32_0 : i32, i32
  }
  func.func @transform_5(%arg0: i32) -> (i32, i32) {
    %c0_i32 = arith.constant 0 : i32
    %c0_i32_0 = arith.constant 0 : i32
    %c0_i32_1 = arith.constant 0 : i32
    return %c0_i32, %c0_i32_0 : i32, i32
  }
  func.func @transform_6(%arg0: i32) -> (i32, i32) {
    %c0_i32 = arith.constant 0 : i32
    %c0_i32_0 = arith.constant 0 : i32
    %c0_i32_1 = arith.constant 0 : i32
    return %c0_i32, %c0_i32_0 : i32, i32
  }
  func.func @transform_7(%arg0: i32) -> (i32, i32) {
    %c0_i32 = arith.constant 0 : i32
    %c0_i32_0 = arith.constant 0 : i32
    return %arg0, %c0_i32 : i32, i32
  }
}

</mosaic_0001>

<llo_original>
// kernel: tpu_custom_call.1
$region0: #{tpu_custom_call.1}
  #allocation0 [shape = 'u32[]', space=smem, size = 0x4, offset = 0x4, fixed_abs, tag = 'smem constant byte address 0x4 - core index']
  #allocation1 [shape = 'u32[72,128]{1,0:T(1,128)}', space=vmem, size = 0x9000, scoped, tag = 'internal scratch']
  %s0 = inlined_call_operand.hbm [shape: bf16[256,896], index: 0, kind: input, shape index: {}]
  %s1 = inlined_call_operand.hbm [shape: bf16[896,128], index: 1, kind: input, shape index: {}]
  %s2 = inlined_call_operand.vmem [shape: f32[1,128], index: 2, kind: input, shape index: {}]
  %s3 = inlined_call_operand.vmem [shape: bf16[128,64], index: 3, kind: input, shape index: {}]
  %s4 = inlined_call_operand.vmem [shape: f32[1,64], index: 4, kind: input, shape index: {}]
  %s5 = inlined_call_operand.vmem [shape: bf16[64,128], index: 5, kind: input, shape index: {}]
  %s6 = inlined_call_operand.vmem [shape: f32[1,128], index: 6, kind: input, shape index: {}]
  %s7 = inlined_call_operand.hbm [shape: f32[256,128], index: 7, kind: output, shape index: {}]
  %s8 = sld [smem:[#allocation0]]
  $region46: #{tpu_custom_call.1} parent=0
    _
  %s10 = ssub.s32 1, %s8
  %s11 = scalar_select 0, %s10, %s8
  $region1: #{tpu_custom_call.1} parent=0
    #allocation2 [shape = 'u8[458752]{0}', space=vmem, size = 0x70000, scoped, tag = 'input window, operand 0, single buffered']
    #allocation3 [shape = 's32[1]{0}', space=sflag, size = 0x4, scoped, tag = 'scoped memory for tpu_custom_call.1']
    #allocation4 [shape = 's32[1]{0}', space=sflag, size = 0x4, scoped, tag = 'scoped memory for tpu_custom_call.1']
    #allocation5 [shape = 'u8[229376]{0}', space=vmem, size = 0x38000, scoped, tag = 'input window, operand 1, single buffered']
    #allocation6 [shape = 's32[1]{0}', space=sflag, size = 0x4, scoped, tag = 'scoped memory for tpu_custom_call.1']
    #allocation7 [shape = 'u8[131072]{0}', space=vmem, size = 0x20000, scoped, tag = 'output window, operand 0, single buffered']
    %12 = vsyncpa [#allocation3], 0
    %13 = vsyncpa [#allocation6], 0
    %14 = vsyncpa [#allocation4], 0
    // Predicated region
    $region2: #{tpu_custom_call.1} parent=1 // pred_check
      _
    $region3: #{tpu_custom_call.1} parent=1 // pred_check_branch
      %16 = sbr.rel (0) target = $region5
    $region4: #{tpu_custom_call.1} parent=1 // pred_region
      %18 = vsyncadd [#allocation3], 0
      %s19 = sshll.u32 %s0, 4
      %s20 = int_to_ptr.hbm [resolvable:$true] %s19
      %s21 = sshll.u32 [#allocation2], 4
      %s22 = int_to_ptr.vmem [resolvable:$true] %s21
      %27 = dma.hbm_to_vmem [thread:$0]  %s20, 14336, %s22, [#allocation3], 448, 448, 28
    $region5: #{tpu_custom_call.1} parent=1 // pred_fallthru
      _
    // Predicated region
    $region6: #{tpu_custom_call.1} parent=1 // pred_check
      _
    $region7: #{tpu_custom_call.1} parent=1 // pred_check_branch
      %29 = sbr.rel (0) target = $region9
    $region8: #{tpu_custom_call.1} parent=1 // pred_region
      %31 = vsyncadd [#allocation6], 0
      %s32 = sshll.u32 %s1, 4
      %s33 = int_to_ptr.hbm [resolvable:$true] %s32
      %s34 = sshll.u32 [#allocation5], 4
      %s35 = int_to_ptr.vmem [resolvable:$true] %s34
      %40 = dma.hbm_to_vmem [thread:$0]  %s33, 7168, %s35, [#allocation6], 64, 64, 4
    $region9: #{tpu_custom_call.1} parent=1 // pred_fallthru
      _
    // Predicated region
    $region10: #{tpu_custom_call.1} parent=1 // pred_check
      _
    $region11: #{tpu_custom_call.1} parent=1 // pred_check_branch
      %42 = sbr.rel (0) target = $region13
    $region12: #{tpu_custom_call.1} parent=1 // pred_region
      _
    $region13: #{tpu_custom_call.1} parent=1 // pred_fallthru
      _
    // Predicated region
    $region14: #{tpu_custom_call.1} parent=1 // pred_check
      _
    $region15: #{tpu_custom_call.1} parent=1 // pred_check_branch
      %44 = sbr.rel (0) target = $region17
    $region16: #{tpu_custom_call.1} parent=1 // pred_region
      _
    $region17: #{tpu_custom_call.1} parent=1 // pred_fallthru
      _
    // Predicated region
    $region18: #{tpu_custom_call.1} parent=1 // pred_check
      _
    $region19: #{tpu_custom_call.1} parent=1 // pred_check_branch
      %46 = sbr.rel (0) target = $region21
    $region20: #{tpu_custom_call.1} parent=1 // pred_region
      _
    $region21: #{tpu_custom_call.1} parent=1 // pred_fallthru
      _
    // Predicated region
    $region22: #{tpu_custom_call.1} parent=1 // pred_check
      _
    $region23: #{tpu_custom_call.1} parent=1 // pred_check_branch
      %48 = sbr.rel (0) target = $region25
    $region24: #{tpu_custom_call.1} parent=1 // pred_region
      _
    $region25: #{tpu_custom_call.1} parent=1 // pred_fallthru
      _
    // Predicated region
    $region26: #{tpu_custom_call.1} parent=1 // pred_check
      _
    $region27: #{tpu_custom_call.1} parent=1 // pred_check_branch
      %50 = sbr.rel (0) target = $region29
    $region28: #{tpu_custom_call.1} parent=1 // pred_region
      _
    $region29: #{tpu_custom_call.1} parent=1 // pred_fallthru
      _
    // Predicated region
    $region30: #{tpu_custom_call.1} parent=1 // pred_check
      _
    $region31: #{tpu_custom_call.1} parent=1 // pred_check_branch
      %52 = sbr.rel (0) target = $region33
    $region32: #{tpu_custom_call.1} parent=1 // pred_region
      %54 = dma.done [#allocation3], 14336
    $region33: #{tpu_custom_call.1} parent=1 // pred_fallthru
      _
    // Predicated region
    $region34: #{tpu_custom_call.1} parent=1 // pred_check
      _
    $region35: #{tpu_custom_call.1} parent=1 // pred_check_branch
      %56 = sbr.rel (0) target = $region37
    $region36: #{tpu_custom_call.1} parent=1 // pred_region
      %58 = dma.done [#allocation6], 7168
    $region37: #{tpu_custom_call.1} parent=1 // pred_fallthru
      _
    %v60 = vld [vmem:[#allocation2] sm:$0xff]
    %v61 = vld [vmem:[#allocation2 + $0x8] sm:$0xff]
    %v62 = vld [vmem:[#allocation2 + $0x10] sm:$0xff]
    %v63 = vld [vmem:[#allocation2 + $0x18] sm:$0xf]
    %v64 = vld [vmem:[#allocation2 + $0x1c] sm:$0xff]
    %v65 = vld [vmem:[#allocation2 + $0x24] sm:$0xff]
    %v66 = vld [vmem:[#allocation2 + $0x2c] sm:$0xff]
    %v67 = vld [vmem:[#allocation2 + $0x34] sm:$0xf]
    %v68 = vld [vmem:[#allocation2 + $0x38] sm:$0xff]
    %v69 = vld [vmem:[#allocation2 + $0x40] sm:$0xff]
    %v70 = vld [vmem:[#allocation2 + $0x48] sm:$0xff]
    %v71 = vld [vmem:[#allocation2 + $0x50] sm:$0xf]
    %v72 = vld [vmem:[#allocation2 + $0x54] sm:$0xff]
    %v73 = vld [vmem:[#allocation2 + $0x5c] sm:$0xff]
    %v74 = vld [vmem:[#allocation2 + $0x64] sm:$0xff]
    %v75 = vld [vmem:[#allocation2 + $0x6c] sm:$0xf]
    %v76 = vld [vmem:[#allocation2 + $0x70] sm:$0xff]
    %v77 = vld [vmem:[#allocation2 + $0x78] sm:$0xff]
    %v78 = vld [vmem:[#allocation2 + $0x80] sm:$0xff]
    %v79 = vld [vmem:[#allocation2 + $0x88] sm:$0xf]
    %v80 = vld [vmem:[#allocation2 + $0x8c] sm:$0xff]
    %v81 = vld [vmem:[#allocation2 + $0x94] sm:$0xff]
    %v82 = vld [vmem:[#allocation2 + $0x9c] sm:$0xff]
    %v83 = vld [vmem:[#allocation2 + $0xa4] sm:$0xf]
    %v84 = vld [vmem:[#allocation2 + $0xa8] sm:$0xff]
    %v85 = vld [vmem:[#allocation2 + $0xb0] sm:$0xff]
    %v86 = vld [vmem:[#allocation2 + $0xb8] sm:$0xff]
    %v87 = vld [vmem:[#allocation2 + $0xc0] sm:$0xf]
    %v88 = vld [vmem:[#allocation2 + $0xc4] sm:$0xff]
    %v89 = vld [vmem:[#allocation2 + $0xcc] sm:$0xff]
    %v90 = vld [vmem:[#allocation2 + $0xd4] sm:$0xff]
    %v91 = vld [vmem:[#allocation2 + $0xdc] sm:$0xf]
    %v92 = vld [vmem:[#allocation2 + $0xe0] sm:$0xff]
    %v93 = vld [vmem:[#allocation2 + $0xe8] sm:$0xff]
    %v94 = vld [vmem:[#allocation2 + $0xf0] sm:$0xff]
    %v95 = vld [vmem:[#allocation2 + $0xf8] sm:$0xf]
    %v96 = vld [vmem:[#allocation2 + $0xfc] sm:$0xff]
    %v97 = vld [vmem:[#allocation2 + $0x104] sm:$0xff]
    %v98 = vld [vmem:[#allocation2 + $0x10c] sm:$0xff]
    %v99 = vld [vmem:[#allocation2 + $0x114] sm:$0xf]
    %v100 = vld [vmem:[#allocation2 + $0x118] sm:$0xff]
    %v101 = vld [vmem:[#allocation2 + $0x120] sm:$0xff]
    %v102 = vld [vmem:[#allocation2 + $0x128] sm:$0xff]
    %v103 = vld [vmem:[#allocation2 + $0x130] sm:$0xf]
    %v104 = vld [vmem:[#allocation2 + $0x134] sm:$0xff]
    %v105 = vld [vmem:[#allocation2 + $0x13c] sm:$0xff]
    %v106 = vld [vmem:[#allocation2 + $0x144] sm:$0xff]
    %v107 = vld [vmem:[#allocation2 + $0x14c] sm:$0xf]
    %v108 = vld [vmem:[#allocation2 + $0x150] sm:$0xff]
    %v109 = vld [vmem:[#allocation2 + $0x158] sm:$0xff]
    %v110 = vld [vmem:[#allocation2 + $0x160] sm:$0xff]
    %v111 = vld [vmem:[#allocation2 + $0x168] sm:$0xf]
    %v112 = vld [vmem:[#allocation2 + $0x16c] sm:$0xff]
    %v113 = vld [vmem:[#allocation2 + $0x174] sm:$0xff]
    %v114 = vld [vmem:[#allocation2 + $0x17c] sm:$0xff]
    %v115 = vld [vmem:[#allocation2 + $0x184] sm:$0xf]
    %v116 = vld [vmem:[#allocation2 + $0x188] sm:$0xff]
    %v117 = vld [vmem:[#allocation2 + $0x190] sm:$0xff]
    %v118 = vld [vmem:[#allocation2 + $0x198] sm:$0xff]
    %v119 = vld [vmem:[#allocation2 + $0x1a0] sm:$0xf]
    %v120 = vld [vmem:[#allocation2 + $0x1a4] sm:$0xff]
    %v121 = vld [vmem:[#allocation2 + $0x1ac] sm:$0xff]
    %v122 = vld [vmem:[#allocation2 + $0x1b4] sm:$0xff]
    %v123 = vld [vmem:[#allocation2 + $0x1bc] sm:$0xf]
    %v124 = vld [vmem:[#allocation2 + $0x1c0] sm:$0xff]
    %v125 = vld [vmem:[#allocation2 + $0x1c8] sm:$0xff]
    %v126 = vld [vmem:[#allocation2 + $0x1d0] sm:$0xff]
    %v127 = vld [vmem:[#allocation2 + $0x1d8] sm:$0xf]
    %v128 = vld [vmem:[#allocation2 + $0x1dc] sm:$0xff]
    %v129 = vld [vmem:[#allocation2 + $0x1e4] sm:$0xff]
    %v130 = vld [vmem:[#allocation2 + $0x1ec] sm:$0xff]
    %v131 = vld [vmem:[#allocation2 + $0x1f4] sm:$0xf]
    %v132 = vld [vmem:[#allocation2 + $0x1f8] sm:$0xff]
    %v133 = vld [vmem:[#allocation2 + $0x200] sm:$0xff]
    %v134 = vld [vmem:[#allocation2 + $0x208] sm:$0xff]
    %v135 = vld [vmem:[#allocation2 + $0x210] sm:$0xf]
    %v136 = vld [vmem:[#allocation2 + $0x214] sm:$0xff]
    %v137 = vld [vmem:[#allocation2 + $0x21c] sm:$0xff]
    %v138 = vld [vmem:[#allocation2 + $0x224] sm:$0xff]
    %v139 = vld [vmem:[#allocation2 + $0x22c] sm:$0xf]
    %v140 = vld [vmem:[#allocation2 + $0x230] sm:$0xff]
    %v141 = vld [vmem:[#allocation2 + $0x238] sm:$0xff]
    %v142 = vld [vmem:[#allocation2 + $0x240] sm:$0xff]
    %v143 = vld [vmem:[#allocation2 + $0x248] sm:$0xf]
    %v144 = vld [vmem:[#allocation2 + $0x24c] sm:$0xff]
    %v145 = vld [vmem:[#allocation2 + $0x254] sm:$0xff]
    %v146 = vld [vmem:[#allocation2 + $0x25c] sm:$0xff]
    %v147 = vld [vmem:[#allocation2 + $0x264] sm:$0xf]
    %v148 = vld [vmem:[#allocation2 + $0x268] sm:$0xff]
    %v149 = vld [vmem:[#allocation2 + $0x270] sm:$0xff]
    %v150 = vld [vmem:[#allocation2 + $0x278] sm:$0xff]
    %v151 = vld [vmem:[#allocation2 + $0x280] sm:$0xf]
    %v152 = vld [vmem:[#allocation2 + $0x284] sm:$0xff]
    %v153 = vld [vmem:[#allocation2 + $0x28c] sm:$0xff]
    %v154 = vld [vmem:[#allocation2 + $0x294] sm:$0xff]
    %v155 = vld [vmem:[#allocation2 + $0x29c] sm:$0xf]
    %v156 = vld [vmem:[#allocation2 + $0x2a0] sm:$0xff]
    %v157 = vld [vmem:[#allocation2 + $0x2a8] sm:$0xff]
    %v158 = vld [vmem:[#allocation2 + $0x2b0] sm:$0xff]
    %v159 = vld [vmem:[#allocation2 + $0x2b8] sm:$0xf]
    %v160 = vld [vmem:[#allocation2 + $0x2bc] sm:$0xff]
    %v161 = vld [vmem:[#allocation2 + $0x2c4] sm:$0xff]
    %v162 = vld [vmem:[#allocation2 + $0x2cc] sm:$0xff]
    %v163 = vld [vmem:[#allocation2 + $0x2d4] sm:$0xf]
    %v164 = vld [vmem:[#allocation2 + $0x2d8] sm:$0xff]
    %v165 = vld [vmem:[#allocation2 + $0x2e0] sm:$0xff]
    %v166 = vld [vmem:[#allocation2 + $0x2e8] sm:$0xff]
    %v167 = vld [vmem:[#allocation2 + $0x2f0] sm:$0xf]
    %v168 = vld [vmem:[#allocation2 + $0x2f4] sm:$0xff]
    %v169 = vld [vmem:[#allocation2 + $0x2fc] sm:$0xff]
    %v170 = vld [vmem:[#allocation2 + $0x304] sm:$0xff]
    %v171 = vld [vmem:[#allocation2 + $0x30c] sm:$0xf]
    %v172 = vld [vmem:[#allocation2 + $0x310] sm:$0xff]
    %v173 = vld [vmem:[#allocation2 + $0x318] sm:$0xff]
    %v174 = vld [vmem:[#allocation2 + $0x320] sm:$0xff]
    %v175 = vld [vmem:[#allocation2 + $0x328] sm:$0xf]
    %v176 = vld [vmem:[#allocation2 + $0x32c] sm:$0xff]
    %v177 = vld [vmem:[#allocation2 + $0x334] sm:$0xff]
    %v178 = vld [vmem:[#allocation2 + $0x33c] sm:$0xff]
    %v179 = vld [vmem:[#allocation2 + $0x344] sm:$0xf]
    %v180 = vld [vmem:[#allocation2 + $0x348] sm:$0xff]
    %v181 = vld [vmem:[#allocation2 + $0x350] sm:$0xff]
    %v182 = vld [vmem:[#allocation2 + $0x358] sm:$0xff]
    %v183 = vld [vmem:[#allocation2 + $0x360] sm:$0xf]
    %v184 = vld [vmem:[#allocation2 + $0x364] sm:$0xff]
    %v185 = vld [vmem:[#allocation2 + $0x36c] sm:$0xff]
    %v186 = vld [vmem:[#allocation2 + $0x374] sm:$0xff]
    %v187 = vld [vmem:[#allocation2 + $0x37c] sm:$0xf]
    %v188 = vld [vmem:[#allocation5] sm:$0xf]
    %v189 = vld [vmem:[#allocation5 + $0x4] sm:$0xf]
    %v190 = vld [vmem:[#allocation5 + $0x8] sm:$0xf]
    %v191 = vld [vmem:[#allocation5 + $0xc] sm:$0xf]
    %v192 = vld [vmem:[#allocation5 + $0x10] sm:$0xf]
    %v193 = vld [vmem:[#allocation5 + $0x14] sm:$0xf]
    %v194 = vld [vmem:[#allocation5 + $0x18] sm:$0xf]
    %v195 = vld [vmem:[#allocation5 + $0x1c] sm:$0xf]
    %v196 = vld [vmem:[#allocation5 + $0x20] sm:$0xf]
    %v197 = vld [vmem:[#allocation5 + $0x24] sm:$0xf]
    %v198 = vld [vmem:[#allocation5 + $0x28] sm:$0xf]
    %v199 = vld [vmem:[#allocation5 + $0x2c] sm:$0xf]
    %v200 = vld [vmem:[#allocation5 + $0x30] sm:$0xf]
    %v201 = vld [vmem:[#allocation5 + $0x34] sm:$0xf]
    %v202 = vld [vmem:[#allocation5 + $0x38] sm:$0xf]
    %v203 = vld [vmem:[#allocation5 + $0x3c] sm:$0xf]
    %v204 = vld [vmem:[#allocation5 + $0x40] sm:$0xf]
    %v205 = vld [vmem:[#allocation5 + $0x44] sm:$0xf]
    %v206 = vld [vmem:[#allocation5 + $0x48] sm:$0xf]
    %v207 = vld [vmem:[#allocation5 + $0x4c] sm:$0xf]
    %v208 = vld [vmem:[#allocation5 + $0x50] sm:$0xf]
    %v209 = vld [vmem:[#allocation5 + $0x54] sm:$0xf]
    %v210 = vld [vmem:[#allocation5 + $0x58] sm:$0xf]
    %v211 = vld [vmem:[#allocation5 + $0x5c] sm:$0xf]
    %v212 = vld [vmem:[#allocation5 + $0x60] sm:$0xf]
    %v213 = vld [vmem:[#allocation5 + $0x64] sm:$0xf]
    %v214 = vld [vmem:[#allocation5 + $0x68] sm:$0xf]
    %v215 = vld [vmem:[#allocation5 + $0x6c] sm:$0xf]
    %v216 = vld [vmem:[#allocation5 + $0x70] sm:$0xf]
    %v217 = vld [vmem:[#allocation5 + $0x74] sm:$0xf]
    %v218 = vld [vmem:[#allocation5 + $0x78] sm:$0xf]
    %v219 = vld [vmem:[#allocation5 + $0x7c] sm:$0xf]
    %v220 = vld [vmem:[#allocation5 + $0x80] sm:$0xf]
    %v221 = vld [vmem:[#allocation5 + $0x84] sm:$0xf]
    %v222 = vld [vmem:[#allocation5 + $0x88] sm:$0xf]
    %v223 = vld [vmem:[#allocation5 + $0x8c] sm:$0xf]
    %v224 = vld [vmem:[#allocation5 + $0x90] sm:$0xf]
    %v225 = vld [vmem:[#allocation5 + $0x94] sm:$0xf]
    %v226 = vld [vmem:[#allocation5 + $0x98] sm:$0xf]
    %v227 = vld [vmem:[#allocation5 + $0x9c] sm:$0xf]
    %v228 = vld [vmem:[#allocation5 + $0xa0] sm:$0xf]
    %v229 = vld [vmem:[#allocation5 + $0xa4] sm:$0xf]
    %v230 = vld [vmem:[#allocation5 + $0xa8] sm:$0xf]
    %v231 = vld [vmem:[#allocation5 + $0xac] sm:$0xf]
    %v232 = vld [vmem:[#allocation5 + $0xb0] sm:$0xf]
    %v233 = vld [vmem:[#allocation5 + $0xb4] sm:$0xf]
    %v234 = vld [vmem:[#allocation5 + $0xb8] sm:$0xf]
    %v235 = vld [vmem:[#allocation5 + $0xbc] sm:$0xf]
    %v236 = vld [vmem:[#allocation5 + $0xc0] sm:$0xf]
    %v237 = vld [vmem:[#allocation5 + $0xc4] sm:$0xf]
    %v238 = vld [vmem:[#allocation5 + $0xc8] sm:$0xf]
    %v239 = vld [vmem:[#allocation5 + $0xcc] sm:$0xf]
    %v240 = vld [vmem:[#allocation5 + $0xd0] sm:$0xf]
    %v241 = vld [vmem:[#allocation5 + $0xd4] sm:$0xf]
    %v242 = vld [vmem:[#allocation5 + $0xd8] sm:$0xf]
    %v243 = vld [vmem:[#allocation5 + $0xdc] sm:$0xf]
    %v244 = vld [vmem:[#allocation5 + $0xe0] sm:$0xf]
    %v245 = vld [vmem:[#allocation5 + $0xe4] sm:$0xf]
    %v246 = vld [vmem:[#allocation5 + $0xe8] sm:$0xf]
    %v247 = vld [vmem:[#allocation5 + $0xec] sm:$0xf]
    %v248 = vld [vmem:[#allocation5 + $0xf0] sm:$0xf]
    %v249 = vld [vmem:[#allocation5 + $0xf4] sm:$0xf]
    %v250 = vld [vmem:[#allocation5 + $0xf8] sm:$0xf]
    %v251 = vld [vmem:[#allocation5 + $0xfc] sm:$0xf]
    %v252 = vld [vmem:[#allocation5 + $0x100] sm:$0xf]
    %v253 = vld [vmem:[#allocation5 + $0x104] sm:$0xf]
    %v254 = vld [vmem:[#allocation5 + $0x108] sm:$0xf]
    %v255 = vld [vmem:[#allocation5 + $0x10c] sm:$0xf]
    %v256 = vld [vmem:[#allocation5 + $0x110] sm:$0xf]
    %v257 = vld [vmem:[#allocation5 + $0x114] sm:$0xf]
    %v258 = vld [vmem:[#allocation5 + $0x118] sm:$0xf]
    %v259 = vld [vmem:[#allocation5 + $0x11c] sm:$0xf]
    %v260 = vld [vmem:[#allocation5 + $0x120] sm:$0xf]
    %v261 = vld [vmem:[#allocation5 + $0x124] sm:$0xf]
    %v262 = vld [vmem:[#allocation5 + $0x128] sm:$0xf]
    %v263 = vld [vmem:[#allocation5 + $0x12c] sm:$0xf]
    %v264 = vld [vmem:[#allocation5 + $0x130] sm:$0xf]
    %v265 = vld [vmem:[#allocation5 + $0x134] sm:$0xf]
    %v266 = vld [vmem:[#allocation5 + $0x138] sm:$0xf]
    %v267 = vld [vmem:[#allocation5 + $0x13c] sm:$0xf]
    %v268 = vld [vmem:[#allocation5 + $0x140] sm:$0xf]
    %v269 = vld [vmem:[#allocation5 + $0x144] sm:$0xf]
    %v270 = vld [vmem:[#allocation5 + $0x148] sm:$0xf]
    %v271 = vld [vmem:[#allocation5 + $0x14c] sm:$0xf]
    %v272 = vld [vmem:[#allocation5 + $0x150] sm:$0xf]
    %v273 = vld [vmem:[#allocation5 + $0x154] sm:$0xf]
    %v274 = vld [vmem:[#allocation5 + $0x158] sm:$0xf]
    %v275 = vld [vmem:[#allocation5 + $0x15c] sm:$0xf]
    %v276 = vld [vmem:[#allocation5 + $0x160] sm:$0xf]
    %v277 = vld [vmem:[#allocation5 + $0x164] sm:$0xf]
    %v278 = vld [vmem:[#allocation5 + $0x168] sm:$0xf]
    %v279 = vld [vmem:[#allocation5 + $0x16c] sm:$0xf]
    %v280 = vld [vmem:[#allocation5 + $0x170] sm:$0xf]
    %v281 = vld [vmem:[#allocation5 + $0x174] sm:$0xf]
    %v282 = vld [vmem:[#allocation5 + $0x178] sm:$0xf]
    %v283 = vld [vmem:[#allocation5 + $0x17c] sm:$0xf]
    %v284 = vld [vmem:[#allocation5 + $0x180] sm:$0xf]
    %v285 = vld [vmem:[#allocation5 + $0x184] sm:$0xf]
    %v286 = vld [vmem:[#allocation5 + $0x188] sm:$0xf]
    %v287 = vld [vmem:[#allocation5 + $0x18c] sm:$0xf]
    %v288 = vld [vmem:[#allocation5 + $0x190] sm:$0xf]
    %v289 = vld [vmem:[#allocation5 + $0x194] sm:$0xf]
    %v290 = vld [vmem:[#allocation5 + $0x198] sm:$0xf]
    %v291 = vld [vmem:[#allocation5 + $0x19c] sm:$0xf]
    %v292 = vld [vmem:[#allocation5 + $0x1a0] sm:$0xf]
    %v293 = vld [vmem:[#allocation5 + $0x1a4] sm:$0xf]
    %v294 = vld [vmem:[#allocation5 + $0x1a8] sm:$0xf]
    %v295 = vld [vmem:[#allocation5 + $0x1ac] sm:$0xf]
    %v296 = vld [vmem:[#allocation5 + $0x1b0] sm:$0xf]
    %v297 = vld [vmem:[#allocation5 + $0x1b4] sm:$0xf]
    %v298 = vld [vmem:[#allocation5 + $0x1b8] sm:$0xf]
    %v299 = vld [vmem:[#allocation5 + $0x1bc] sm:$0xf]
    %v300 = vld [vmem:[%s2] sm:$0x1]
    %v302 = vperm.slane %v300, 0
    %v432 = vunpack.c.l.b16 %v60
    %v433 = vunpack.c.h.b16 %v60
    %v434 = vunpack.c.l.b16 %v61
    %v435 = vunpack.c.h.b16 %v61
    %v436 = vunpack.c.l.b16 %v62
    %v437 = vunpack.c.h.b16 %v62
    %v438 = vunpack.c.l.b16 %v63
    %v439 = vunpack.c.l.b16 %v64
    %v440 = vunpack.c.h.b16 %v64
    %v441 = vunpack.c.l.b16 %v65
    %v442 = vunpack.c.h.b16 %v65
    %v443 = vunpack.c.l.b16 %v66
    %v444 = vunpack.c.h.b16 %v66
    %v445 = vunpack.c.l.b16 %v67
    %v446 = vunpack.c.l.b16 %v68
    %v447 = vunpack.c.h.b16 %v68
    %v448 = vunpack.c.l.b16 %v69
    %v449 = vunpack.c.h.b16 %v69
    %v450 = vunpack.c.l.b16 %v70
    %v451 = vunpack.c.h.b16 %v70
    %v452 = vunpack.c.l.b16 %v71
    %v453 = vunpack.c.l.b16 %v72
    %v454 = vunpack.c.h.b16 %v72
    %v455 = vunpack.c.l.b16 %v73
    %v456 = vunpack.c.h.b16 %v73
    %v457 = vunpack.c.l.b16 %v74
    %v458 = vunpack.c.h.b16 %v74
    %v459 = vunpack.c.l.b16 %v75
    %v460 = vunpack.c.l.b16 %v76
    %v461 = vunpack.c.h.b16 %v76
    %v462 = vunpack.c.l.b16 %v77
    %v463 = vunpack.c.h.b16 %v77
    %v464 = vunpack.c.l.b16 %v78
    %v465 = vunpack.c.h.b16 %v78
    %v466 = vunpack.c.l.b16 %v79
    %v467 = vunpack.c.l.b16 %v80
    %v468 = vunpack.c.h.b16 %v80
    %v469 = vunpack.c.l.b16 %v81
    %v470 = vunpack.c.h.b16 %v81
    %v471 = vunpack.c.l.b16 %v82
    %v472 = vunpack.c.h.b16 %v82
    %v473 = vunpack.c.l.b16 %v83
    %v474 = vunpack.c.l.b16 %v84
    %v475 = vunpack.c.h.b16 %v84
    %v476 = vunpack.c.l.b16 %v85
    %v477 = vunpack.c.h.b16 %v85
    %v478 = vunpack.c.l.b16 %v86
    %v479 = vunpack.c.h.b16 %v86
    %v480 = vunpack.c.l.b16 %v87
    %v481 = vunpack.c.l.b16 %v88
    %v482 = vunpack.c.h.b16 %v88
    %v483 = vunpack.c.l.b16 %v89
    %v484 = vunpack.c.h.b16 %v89
    %v485 = vunpack.c.l.b16 %v90
    %v486 = vunpack.c.h.b16 %v90
    %v487 = vunpack.c.l.b16 %v91
    %v488 = vunpack.c.l.b16 %v92
    %v489 = vunpack.c.h.b16 %v92
    %v490 = vunpack.c.l.b16 %v93
    %v491 = vunpack.c.h.b16 %v93
    %v492 = vunpack.c.l.b16 %v94
    %v493 = vunpack.c.h.b16 %v94
    %v494 = vunpack.c.l.b16 %v95
    %v495 = vunpack.c.l.b16 %v96
    %v496 = vunpack.c.h.b16 %v96
    %v497 = vunpack.c.l.b16 %v97
    %v498 = vunpack.c.h.b16 %v97
    %v499 = vunpack.c.l.b16 %v98
    %v500 = vunpack.c.h.b16 %v98
    %v501 = vunpack.c.l.b16 %v99
    %v502 = vunpack.c.l.b16 %v100
    %v503 = vunpack.c.h.b16 %v100
    %v504 = vunpack.c.l.b16 %v101
    %v505 = vunpack.c.h.b16 %v101
    %v506 = vunpack.c.l.b16 %v102
    %v507 = vunpack.c.h.b16 %v102
    %v508 = vunpack.c.l.b16 %v103
    %v509 = vunpack.c.l.b16 %v104
    %v510 = vunpack.c.h.b16 %v104
    %v511 = vunpack.c.l.b16 %v105
    %v512 = vunpack.c.h.b16 %v105
    %v513 = vunpack.c.l.b16 %v106
    %v514 = vunpack.c.h.b16 %v106
    %v515 = vunpack.c.l.b16 %v107
    %v516 = vunpack.c.l.b16 %v108
    %v517 = vunpack.c.h.b16 %v108
    %v518 = vunpack.c.l.b16 %v109
    %v519 = vunpack.c.h.b16 %v109
    %v520 = vunpack.c.l.b16 %v110
    %v521 = vunpack.c.h.b16 %v110
    %v522 = vunpack.c.l.b16 %v111
    %v523 = vunpack.c.l.b16 %v112
    %v524 = vunpack.c.h.b16 %v112
    %v525 = vunpack.c.l.b16 %v113
    %v526 = vunpack.c.h.b16 %v113
    %v527 = vunpack.c.l.b16 %v114
    %v528 = vunpack.c.h.b16 %v114
    %v529 = vunpack.c.l.b16 %v115
    %v530 = vunpack.c.l.b16 %v116
    %v531 = vunpack.c.h.b16 %v116
    %v532 = vunpack.c.l.b16 %v117
    %v533 = vunpack.c.h.b16 %v117
    %v534 = vunpack.c.l.b16 %v118
    %v535 = vunpack.c.h.b16 %v118
    %v536 = vunpack.c.l.b16 %v119
    %v537 = vunpack.c.l.b16 %v120
    %v538 = vunpack.c.h.b16 %v120
    %v539 = vunpack.c.l.b16 %v121
    %v540 = vunpack.c.h.b16 %v121
    %v541 = vunpack.c.l.b16 %v122
    %v542 = vunpack.c.h.b16 %v122
    %v543 = vunpack.c.l.b16 %v123
    %v544 = vunpack.c.l.b16 %v124
    %v545 = vunpack.c.h.b16 %v124
    %v546 = vunpack.c.l.b16 %v125
    %v547 = vunpack.c.h.b16 %v125
    %v548 = vunpack.c.l.b16 %v126
    %v549 = vunpack.c.h.b16 %v126
    %v550 = vunpack.c.l.b16 %v127
    %v551 = vunpack.c.l.b16 %v128
    %v552 = vunpack.c.h.b16 %v128
    %v553 = vunpack.c.l.b16 %v129
    %v554 = vunpack.c.h.b16 %v129
    %v555 = vunpack.c.l.b16 %v130
    %v556 = vunpack.c.h.b16 %v130
    %v557 = vunpack.c.l.b16 %v131
    %v558 = vunpack.c.l.b16 %v132
    %v559 = vunpack.c.h.b16 %v132
    %v560 = vunpack.c.l.b16 %v133
    %v561 = vunpack.c.h.b16 %v133
    %v562 = vunpack.c.l.b16 %v134
    %v563 = vunpack.c.h.b16 %v134
    %v564 = vunpack.c.l.b16 %v135
    %v565 = vunpack.c.l.b16 %v136
    %v566 = vunpack.c.h.b16 %v136
    %v567 = vunpack.c.l.b16 %v137
    %v568 = vunpack.c.h.b16 %v137
    %v569 = vunpack.c.l.b16 %v138
    %v570 = vunpack.c.h.b16 %v138
    %v571 = vunpack.c.l.b16 %v139
    %v572 = vunpack.c.l.b16 %v140
    %v573 = vunpack.c.h.b16 %v140
    %v574 = vunpack.c.l.b16 %v141
    %v575 = vunpack.c.h.b16 %v141
    %v576 = vunpack.c.l.b16 %v142
    %v577 = vunpack.c.h.b16 %v142
    %v578 = vunpack.c.l.b16 %v143
    %v579 = vunpack.c.l.b16 %v144
    %v580 = vunpack.c.h.b16 %v144
    %v581 = vunpack.c.l.b16 %v145
    %v582 = vunpack.c.h.b16 %v145
    %v583 = vunpack.c.l.b16 %v146
    %v584 = vunpack.c.h.b16 %v146
    %v585 = vunpack.c.l.b16 %v147
    %v586 = vunpack.c.l.b16 %v148
    %v587 = vunpack.c.h.b16 %v148
    %v588 = vunpack.c.l.b16 %v149
    %v589 = vunpack.c.h.b16 %v149
    %v590 = vunpack.c.l.b16 %v150
    %v591 = vunpack.c.h.b16 %v150
    %v592 = vunpack.c.l.b16 %v151
    %v593 = vunpack.c.l.b16 %v152
    %v594 = vunpack.c.h.b16 %v152
    %v595 = vunpack.c.l.b16 %v153
    %v596 = vunpack.c.h.b16 %v153
    %v597 = vunpack.c.l.b16 %v154
    %v598 = vunpack.c.h.b16 %v154
    %v599 = vunpack.c.l.b16 %v155
    %v600 = vunpack.c.l.b16 %v156
    %v601 = vunpack.c.h.b16 %v156
    %v602 = vunpack.c.l.b16 %v157
    %v603 = vunpack.c.h.b16 %v157
    %v604 = vunpack.c.l.b16 %v158
    %v605 = vunpack.c.h.b16 %v158
    %v606 = vunpack.c.l.b16 %v159
    %v607 = vunpack.c.l.b16 %v160
    %v608 = vunpack.c.h.b16 %v160
    %v609 = vunpack.c.l.b16 %v161
    %v610 = vunpack.c.h.b16 %v161
    %v611 = vunpack.c.l.b16 %v162
    %v612 = vunpack.c.h.b16 %v162
    %v613 = vunpack.c.l.b16 %v163
    %v614 = vunpack.c.l.b16 %v164
    %v615 = vunpack.c.h.b16 %v164
    %v616 = vunpack.c.l.b16 %v165
    %v617 = vunpack.c.h.b16 %v165
    %v618 = vunpack.c.l.b16 %v166
    %v619 = vunpack.c.h.b16 %v166
    %v620 = vunpack.c.l.b16 %v167
    %v621 = vunpack.c.l.b16 %v168
    %v622 = vunpack.c.h.b16 %v168
    %v623 = vunpack.c.l.b16 %v169
    %v624 = vunpack.c.h.b16 %v169
    %v625 = vunpack.c.l.b16 %v170
    %v626 = vunpack.c.h.b16 %v170
    %v627 = vunpack.c.l.b16 %v171
    %v628 = vunpack.c.l.b16 %v172
    %v629 = vunpack.c.h.b16 %v172
    %v630 = vunpack.c.l.b16 %v173
    %v631 = vunpack.c.h.b16 %v173
    %v632 = vunpack.c.l.b16 %v174
    %v633 = vunpack.c.h.b16 %v174
    %v634 = vunpack.c.l.b16 %v175
    %v635 = vunpack.c.l.b16 %v176
    %v636 = vunpack.c.h.b16 %v176
    %v637 = vunpack.c.l.b16 %v177
    %v638 = vunpack.c.h.b16 %v177
    %v639 = vunpack.c.l.b16 %v178
    %v640 = vunpack.c.h.b16 %v178
    %v641 = vunpack.c.l.b16 %v179
    %v642 = vunpack.c.l.b16 %v180
    %v643 = vunpack.c.h.b16 %v180
    %v644 = vunpack.c.l.b16 %v181
    %v645 = vunpack.c.h.b16 %v181
    %v646 = vunpack.c.l.b16 %v182
    %v647 = vunpack.c.h.b16 %v182
    %v648 = vunpack.c.l.b16 %v183
    %v649 = vunpack.c.l.b16 %v184
    %v650 = vunpack.c.h.b16 %v184
    %v651 = vunpack.c.l.b16 %v185
    %v652 = vunpack.c.h.b16 %v185
    %v653 = vunpack.c.l.b16 %v186
    %v654 = vunpack.c.h.b16 %v186
    %v655 = vunpack.c.l.b16 %v187
    %v656 = vpack.c.b16 %v439, %v432
    %v657 = vpack.c.b16 %v440, %v433
    %v658 = vpack.c.b16 %v441, %v434
    %v659 = vpack.c.b16 %v442, %v435
    %v660 = vpack.c.b16 %v443, %v436
    %v661 = vpack.c.b16 %v444, %v437
    %v662 = vpack.c.b16 %v445, %v438
    %v663 = vpack.c.b16 %v453, %v446
    %v664 = vpack.c.b16 %v454, %v447
    %v665 = vpack.c.b16 %v455, %v448
    %v666 = vpack.c.b16 %v456, %v449
    %v667 = vpack.c.b16 %v457, %v450
    %v668 = vpack.c.b16 %v458, %v451
    %v669 = vpack.c.b16 %v459, %v452
    %v670 = vpack.c.b16 %v467, %v460
    %v671 = vpack.c.b16 %v468, %v461
    %v672 = vpack.c.b16 %v469, %v462
    %v673 = vpack.c.b16 %v470, %v463
    %v674 = vpack.c.b16 %v471, %v464
    %v675 = vpack.c.b16 %v472, %v465
    %v676 = vpack.c.b16 %v473, %v466
    %v677 = vpack.c.b16 %v481, %v474
    %v678 = vpack.c.b16 %v482, %v475
    %v679 = vpack.c.b16 %v483, %v476
    %v680 = vpack.c.b16 %v484, %v477
    %v681 = vpack.c.b16 %v485, %v478
    %v682 = vpack.c.b16 %v486, %v479
    %v683 = vpack.c.b16 %v487, %v480
    %v684 = vpack.c.b16 %v495, %v488
    %v685 = vpack.c.b16 %v496, %v489
    %v686 = vpack.c.b16 %v497, %v490
    %v687 = vpack.c.b16 %v498, %v491
    %v688 = vpack.c.b16 %v499, %v492
    %v689 = vpack.c.b16 %v500, %v493
    %v690 = vpack.c.b16 %v501, %v494
    %v691 = vpack.c.b16 %v509, %v502
    %v692 = vpack.c.b16 %v510, %v503
    %v693 = vpack.c.b16 %v511, %v504
    %v694 = vpack.c.b16 %v512, %v505
    %v695 = vpack.c.b16 %v513, %v506
    %v696 = vpack.c.b16 %v514, %v507
    %v697 = vpack.c.b16 %v515, %v508
    %v698 = vpack.c.b16 %v523, %v516
    %v699 = vpack.c.b16 %v524, %v517
    %v700 = vpack.c.b16 %v525, %v518
    %v701 = vpack.c.b16 %v526, %v519
    %v702 = vpack.c.b16 %v527, %v520
    %v703 = vpack.c.b16 %v528, %v521
    %v704 = vpack.c.b16 %v529, %v522
    %v705 = vpack.c.b16 %v537, %v530
    %v706 = vpack.c.b16 %v538, %v531
    %v707 = vpack.c.b16 %v539, %v532
    %v708 = vpack.c.b16 %v540, %v533
    %v709 = vpack.c.b16 %v541, %v534
    %v710 = vpack.c.b16 %v542, %v535
    %v711 = vpack.c.b16 %v543, %v536
    %v712 = vpack.c.b16 %v551, %v544
    %v713 = vpack.c.b16 %v552, %v545
    %v714 = vpack.c.b16 %v553, %v546
    %v715 = vpack.c.b16 %v554, %v547
    %v716 = vpack.c.b16 %v555, %v548
    %v717 = vpack.c.b16 %v556, %v549
    %v718 = vpack.c.b16 %v557, %v550
    %v719 = vpack.c.b16 %v565, %v558
    %v720 = vpack.c.b16 %v566, %v559
    %v721 = vpack.c.b16 %v567, %v560
    %v722 = vpack.c.b16 %v568, %v561
    %v723 = vpack.c.b16 %v569, %v562
    %v724 = vpack.c.b16 %v570, %v563
    %v725 = vpack.c.b16 %v571, %v564
    %v726 = vpack.c.b16 %v579, %v572
    %v727 = vpack.c.b16 %v580, %v573
    %v728 = vpack.c.b16 %v581, %v574
    %v729 = vpack.c.b16 %v582, %v575
    %v730 = vpack.c.b16 %v583, %v576
    %v731 = vpack.c.b16 %v584, %v577
    %v732 = vpack.c.b16 %v585, %v578
    %v733 = vpack.c.b16 %v593, %v586
    %v734 = vpack.c.b16 %v594, %v587
    %v735 = vpack.c.b16 %v595, %v588
    %v736 = vpack.c.b16 %v596, %v589
    %v737 = vpack.c.b16 %v597, %v590
    %v738 = vpack.c.b16 %v598, %v591
    %v739 = vpack.c.b16 %v599, %v592
    %v740 = vpack.c.b16 %v607, %v600
    %v741 = vpack.c.b16 %v608, %v601
    %v742 = vpack.c.b16 %v609, %v602
    %v743 = vpack.c.b16 %v610, %v603
    %v744 = vpack.c.b16 %v611, %v604
    %v745 = vpack.c.b16 %v612, %v605
    %v746 = vpack.c.b16 %v613, %v606
    %v747 = vpack.c.b16 %v621, %v614
    %v748 = vpack.c.b16 %v622, %v615
    %v749 = vpack.c.b16 %v623, %v616
    %v750 = vpack.c.b16 %v624, %v617
    %v751 = vpack.c.b16 %v625, %v618
    %v752 = vpack.c.b16 %v626, %v619
    %v753 = vpack.c.b16 %v627, %v620
    %v754 = vpack.c.b16 %v635, %v628
    %v755 = vpack.c.b16 %v636, %v629
    %v756 = vpack.c.b16 %v637, %v630
    %v757 = vpack.c.b16 %v638, %v631
    %v758 = vpack.c.b16 %v639, %v632
    %v759 = vpack.c.b16 %v640, %v633
    %v760 = vpack.c.b16 %v641, %v634
    %v761 = vpack.c.b16 %v649, %v642
    %v762 = vpack.c.b16 %v650, %v643
    %v763 = vpack.c.b16 %v651, %v644
    %v764 = vpack.c.b16 %v652, %v645
    %v765 = vpack.c.b16 %v653, %v646
    %v766 = vpack.c.b16 %v654, %v647
    %v767 = vpack.c.b16 %v655, %v648
    %v992 = vunpack.c.l.b16 %v188
    %v993 = vunpack.c.l.b16 %v189
    %v994 = vunpack.c.l.b16 %v190
    %v995 = vunpack.c.l.b16 %v191
    %v996 = vunpack.c.l.b16 %v192
    %v997 = vunpack.c.l.b16 %v193
    %v998 = vunpack.c.l.b16 %v194
    %v999 = vunpack.c.l.b16 %v195
    %v1000 = vunpack.c.l.b16 %v196
    %v1001 = vunpack.c.l.b16 %v197
    %v1002 = vunpack.c.l.b16 %v198
    %v1003 = vunpack.c.l.b16 %v199
    %v1004 = vunpack.c.l.b16 %v200
    %v1005 = vunpack.c.l.b16 %v201
    %v1006 = vunpack.c.l.b16 %v202
    %v1007 = vunpack.c.l.b16 %v203
    %v1008 = vunpack.c.l.b16 %v204
    %v1009 = vunpack.c.l.b16 %v205
    %v1010 = vunpack.c.l.b16 %v206
    %v1011 = vunpack.c.l.b16 %v207
    %v1012 = vunpack.c.l.b16 %v208
    %v1013 = vunpack.c.l.b16 %v209
    %v1014 = vunpack.c.l.b16 %v210
    %v1015 = vunpack.c.l.b16 %v211
    %v1016 = vunpack.c.l.b16 %v212
    %v1017 = vunpack.c.l.b16 %v213
    %v1018 = vunpack.c.l.b16 %v214
    %v1019 = vunpack.c.l.b16 %v215
    %v1020 = vunpack.c.l.b16 %v216
    %v1021 = vunpack.c.l.b16 %v217
    %v1022 = vunpack.c.l.b16 %v218
    %v1023 = vunpack.c.l.b16 %v219
    %v1024 = vunpack.c.l.b16 %v220
    %v1025 = vunpack.c.l.b16 %v221
    %v1026 = vunpack.c.l.b16 %v222
    %v1027 = vunpack.c.l.b16 %v223
    %v1028 = vunpack.c.l.b16 %v224
    %v1029 = vunpack.c.l.b16 %v225
    %v1030 = vunpack.c.l.b16 %v226
    %v1031 = vunpack.c.l.b16 %v227
    %v1032 = vunpack.c.l.b16 %v228
    %v1033 = vunpack.c.l.b16 %v229
    %v1034 = vunpack.c.l.b16 %v230
    %v1035 = vunpack.c.l.b16 %v231
    %v1036 = vunpack.c.l.b16 %v232
    %v1037 = vunpack.c.l.b16 %v233
    %v1038 = vunpack.c.l.b16 %v234
    %v1039 = vunpack.c.l.b16 %v235
    %v1040 = vunpack.c.l.b16 %v236
    %v1041 = vunpack.c.l.b16 %v237
    %v1042 = vunpack.c.l.b16 %v238
    %v1043 = vunpack.c.l.b16 %v239
    %v1044 = vunpack.c.l.b16 %v240
    %v1045 = vunpack.c.l.b16 %v241
    %v1046 = vunpack.c.l.b16 %v242
    %v1047 = vunpack.c.l.b16 %v243
    %v1048 = vunpack.c.l.b16 %v244
    %v1049 = vunpack.c.l.b16 %v245
    %v1050 = vunpack.c.l.b16 %v246
    %v1051 = vunpack.c.l.b16 %v247
    %v1052 = vunpack.c.l.b16 %v248
    %v1053 = vunpack.c.l.b16 %v249
    %v1054 = vunpack.c.l.b16 %v250
    %v1055 = vunpack.c.l.b16 %v251
    %v1056 = vunpack.c.l.b16 %v252
    %v1057 = vunpack.c.l.b16 %v253
    %v1058 = vunpack.c.l.b16 %v254
    %v1059 = vunpack.c.l.b16 %v255
    %v1060 = vunpack.c.l.b16 %v256
    %v1061 = vunpack.c.l.b16 %v257
    %v1062 = vunpack.c.l.b16 %v258
    %v1063 = vunpack.c.l.b16 %v259
    %v1064 = vunpack.c.l.b16 %v260
    %v1065 = vunpack.c.l.b16 %v261
    %v1066 = vunpack.c.l.b16 %v262
    %v1067 = vunpack.c.l.b16 %v263
    %v1068 = vunpack.c.l.b16 %v264
    %v1069 = vunpack.c.l.b16 %v265
    %v1070 = vunpack.c.l.b16 %v266
    %v1071 = vunpack.c.l.b16 %v267
    %v1072 = vunpack.c.l.b16 %v268
    %v1073 = vunpack.c.l.b16 %v269
    %v1074 = vunpack.c.l.b16 %v270
    %v1075 = vunpack.c.l.b16 %v271
    %v1076 = vunpack.c.l.b16 %v272
    %v1077 = vunpack.c.l.b16 %v273
    %v1078 = vunpack.c.l.b16 %v274
    %v1079 = vunpack.c.l.b16 %v275
    %v1080 = vunpack.c.l.b16 %v276
    %v1081 = vunpack.c.l.b16 %v277
    %v1082 = vunpack.c.l.b16 %v278
    %v1083 = vunpack.c.l.b16 %v279
    %v1084 = vunpack.c.l.b16 %v280
    %v1085 = vunpack.c.l.b16 %v281
    %v1086 = vunpack.c.l.b16 %v282
    %v1087 = vunpack.c.l.b16 %v283
    %v1088 = vunpack.c.l.b16 %v284
    %v1089 = vunpack.c.l.b16 %v285
    %v1090 = vunpack.c.l.b16 %v286
    %v1091 = vunpack.c.l.b16 %v287
    %v1092 = vunpack.c.l.b16 %v288
    %v1093 = vunpack.c.l.b16 %v289
    %v1094 = vunpack.c.l.b16 %v290
    %v1095 = vunpack.c.l.b16 %v291
    %v1096 = vunpack.c.l.b16 %v292
    %v1097 = vunpack.c.l.b16 %v293
    %v1098 = vunpack.c.l.b16 %v294
    %v1099 = vunpack.c.l.b16 %v295
    %v1100 = vunpack.c.l.b16 %v296
    %v1101 = vunpack.c.l.b16 %v297
    %v1102 = vunpack.c.l.b16 %v298
    %v1103 = vunpack.c.l.b16 %v299
    %v1104 = vpack.c.b16 %v993, %v992
    %v1105 = vpack.c.b16 %v995, %v994
    %v1106 = vpack.c.b16 %v997, %v996
    %v1107 = vpack.c.b16 %v999, %v998
    %v1108 = vpack.c.b16 %v1001, %v1000
    %v1109 = vpack.c.b16 %v1003, %v1002
    %v1110 = vpack.c.b16 %v1005, %v1004
    %v1111 = vpack.c.b16 %v1007, %v1006
    %v1112 = vpack.c.b16 %v1009, %v1008
    %v1113 = vpack.c.b16 %v1011, %v1010
    %v1114 = vpack.c.b16 %v1013, %v1012
    %v1115 = vpack.c.b16 %v1015, %v1014
    %v1116 = vpack.c.b16 %v1017, %v1016
    %v1117 = vpack.c.b16 %v1019, %v1018
    %v1118 = vpack.c.b16 %v1021, %v1020
    %v1119 = vpack.c.b16 %v1023, %v1022
    %v1120 = vpack.c.b16 %v1025, %v1024
    %v1121 = vpack.c.b16 %v1027, %v1026
    %v1122 = vpack.c.b16 %v1029, %v1028
    %v1123 = vpack.c.b16 %v1031, %v1030
    %v1124 = vpack.c.b16 %v1033, %v1032
    %v1125 = vpack.c.b16 %v1035, %v1034
    %v1126 = vpack.c.b16 %v1037, %v1036
    %v1127 = vpack.c.b16 %v1039, %v1038
    %v1128 = vpack.c.b16 %v1041, %v1040
    %v1129 = vpack.c.b16 %v1043, %v1042
    %v1130 = vpack.c.b16 %v1045, %v1044
    %v1131 = vpack.c.b16 %v1047, %v1046
    %v1132 = vpack.c.b16 %v1049, %v1048
    %v1133 = vpack.c.b16 %v1051, %v1050
    %v1134 = vpack.c.b16 %v1053, %v1052
    %v1135 = vpack.c.b16 %v1055, %v1054
    %v1136 = vpack.c.b16 %v1057, %v1056
    %v1137 = vpack.c.b16 %v1059, %v1058
    %v1138 = vpack.c.b16 %v1061, %v1060
    %v1139 = vpack.c.b16 %v1063, %v1062
    %v1140 = vpack.c.b16 %v1065, %v1064
    %v1141 = vpack.c.b16 %v1067, %v1066
    %v1142 = vpack.c.b16 %v1069, %v1068
    %v1143 = vpack.c.b16 %v1071, %v1070
    %v1144 = vpack.c.b16 %v1073, %v1072
    %v1145 = vpack.c.b16 %v1075, %v1074
    %v1146 = vpack.c.b16 %v1077, %v1076
    %v1147 = vpack.c.b16 %v1079, %v1078
    %v1148 = vpack.c.b16 %v1081, %v1080
    %v1149 = vpack.c.b16 %v1083, %v1082
    %v1150 = vpack.c.b16 %v1085, %v1084
    %v1151 = vpack.c.b16 %v1087, %v1086
    %v1152 = vpack.c.b16 %v1089, %v1088
    %v1153 = vpack.c.b16 %v1091, %v1090
    %v1154 = vpack.c.b16 %v1093, %v1092
    %v1155 = vpack.c.b16 %v1095, %v1094
    %v1156 = vpack.c.b16 %v1097, %v1096
    %v1157 = vpack.c.b16 %v1099, %v1098
    %v1158 = vpack.c.b16 %v1101, %v1100
    %v1159 = vpack.c.b16 %v1103, %v1102
    %1216 = vmatpush.bf16.msra.mxu0 %v1111
    %1217 = vmatpush.bf16.msra.mxu0 %v1110
    %1218 = vmatpush.bf16.msra.mxu0 %v1109
    %1219 = vmatpush.bf16.msra.mxu0 %v1108
    %1220 = vmatpush.bf16.msra.mxu0 %v1107
    %1221 = vmatpush.bf16.msra.mxu0 %v1106
    %1222 = vmatpush.bf16.msra.mxu0 %v1105
    %1223 = vmatpush.bf16.msra.mxu0 %v1104
    %1224 = vmatmul.bf16.gmra.mxu0 %v656
    %v1225 = vpop.f32.mrf.mxu0
    %v1226 = vadd.f32 %v302, %v1225
    %v1227 = vpop.f32.mrf.mxu0
    %v1228 = vadd.f32 %v302, %v1227
    %1229 = vmatmul.bf16.gmra.mxu0 %v663
    %v1230 = vpop.f32.mrf.mxu0
    %v1231 = vadd.f32 %v302, %v1230
    %v1232 = vpop.f32.mrf.mxu0
    %v1233 = vadd.f32 %v302, %v1232
    %1234 = vmatmul.bf16.gmra.mxu0 %v670
    %v1235 = vpop.f32.mrf.mxu0
    %v1236 = vadd.f32 %v302, %v1235
    %v1237 = vpop.f32.mrf.mxu0
    %v1238 = vadd.f32 %v302, %v1237
    %1239 = vmatmul.bf16.gmra.mxu0 %v677
    %v1240 = vpop.f32.mrf.mxu0
    %v1241 = vadd.f32 %v302, %v1240
    %v1242 = vpop.f32.mrf.mxu0
    %v1243 = vadd.f32 %v302, %v1242
    %1244 = vmatmul.bf16.gmra.mxu0 %v684
    %v1245 = vpop.f32.mrf.mxu0
    %v1246 = vadd.f32 %v302, %v1245
    %v1247 = vpop.f32.mrf.mxu0
    %v1248 = vadd.f32 %v302, %v1247
    %1249 = vmatmul.bf16.gmra.mxu0 %v691
    %v1250 = vpop.f32.mrf.mxu0
    %v1251 = vadd.f32 %v302, %v1250
    %v1252 = vpop.f32.mrf.mxu0
    %v1253 = vadd.f32 %v302, %v1252
    %1254 = vmatmul.bf16.gmra.mxu0 %v698
    %v1255 = vpop.f32.mrf.mxu0
    %v1256 = vadd.f32 %v302, %v1255
    %v1257 = vpop.f32.mrf.mxu0
    %v1258 = vadd.f32 %v302, %v1257
    %1259 = vmatmul.bf16.gmra.mxu0 %v705
    %v1260 = vpop.f32.mrf.mxu0
    %v1261 = vadd.f32 %v302, %v1260
    %v1262 = vpop.f32.mrf.mxu0
    %v1263 = vadd.f32 %v302, %v1262
    %1264 = vmatmul.bf16.gmra.mxu0 %v712
    %v1265 = vpop.f32.mrf.mxu0
    %v1266 = vadd.f32 %v302, %v1265
    %v1267 = vpop.f32.mrf.mxu0
    %v1268 = vadd.f32 %v302, %v1267
    %1269 = vmatmul.bf16.gmra.mxu0 %v719
    %v1270 = vpop.f32.mrf.mxu0
    %v1271 = vadd.f32 %v302, %v1270
    %v1272 = vpop.f32.mrf.mxu0
    %v1273 = vadd.f32 %v302, %v1272
    %1274 = vmatmul.bf16.gmra.mxu0 %v726
    %v1275 = vpop.f32.mrf.mxu0
    %v1276 = vadd.f32 %v302, %v1275
    %v1277 = vpop.f32.mrf.mxu0
    %v1278 = vadd.f32 %v302, %v1277
    %1279 = vmatmul.bf16.gmra.mxu0 %v733
    %v1280 = vpop.f32.mrf.mxu0
    %v1281 = vadd.f32 %v302, %v1280
    %v1282 = vpop.f32.mrf.mxu0
    %v1283 = vadd.f32 %v302, %v1282
    %1284 = vmatmul.bf16.gmra.mxu0 %v740
    %v1285 = vpop.f32.mrf.mxu0
    %v1286 = vadd.f32 %v302, %v1285
    %v1287 = vpop.f32.mrf.mxu0
    %v1288 = vadd.f32 %v302, %v1287
    %1289 = vmatmul.bf16.gmra.mxu0 %v747
    %v1290 = vpop.f32.mrf.mxu0
    %v1291 = vadd.f32 %v302, %v1290
    %v1292 = vpop.f32.mrf.mxu0
    %v1293 = vadd.f32 %v302, %v1292
    %1294 = vmatmul.bf16.gmra.mxu0 %v754
    %v1295 = vpop.f32.mrf.mxu0
    %v1296 = vadd.f32 %v302, %v1295
    %v1297 = vpop.f32.mrf.mxu0
    %v1298 = vadd.f32 %v302, %v1297
    %1299 = vmatmul.bf16.gmra.mxu0 %v761
    %v1300 = vpop.f32.mrf.mxu0
    %v1301 = vadd.f32 %v302, %v1300
    %v1302 = vpop.f32.mrf.mxu0
    %v1303 = vadd.f32 %v302, %v1302
    %1304 = vdwg.mxu0
    %1305 = vmatpush.bf16.msra.mxu0 %v1119
    %1306 = vmatpush.bf16.msra.mxu0 %v1118
    %1307 = vmatpush.bf16.msra.mxu0 %v1117
    %1308 = vmatpush.bf16.msra.mxu0 %v1116
    %1309 = vmatpush.bf16.msra.mxu0 %v1115
    %1310 = vmatpush.bf16.msra.mxu0 %v1114
    %1311 = vmatpush.bf16.msra.mxu0 %v1113
    %1312 = vmatpush.bf16.msra.mxu0 %v1112
    %1313 = vmatmul.bf16.gmra.mxu0 %v657
    %v1314 = vpop.f32.mrf.mxu0
    %v1315 = vadd.f32 %v1226, %v1314
    %v1316 = vpop.f32.mrf.mxu0
    %v1317 = vadd.f32 %v1228, %v1316
    %1318 = vmatmul.bf16.gmra.mxu0 %v664
    %v1319 = vpop.f32.mrf.mxu0
    %v1320 = vadd.f32 %v1231, %v1319
    %v1321 = vpop.f32.mrf.mxu0
    %v1322 = vadd.f32 %v1233, %v1321
    %1323 = vmatmul.bf16.gmra.mxu0 %v671
    %v1324 = vpop.f32.mrf.mxu0
    %v1325 = vadd.f32 %v1236, %v1324
    %v1326 = vpop.f32.mrf.mxu0
    %v1327 = vadd.f32 %v1238, %v1326
    %1328 = vmatmul.bf16.gmra.mxu0 %v678
    %v1329 = vpop.f32.mrf.mxu0
    %v1330 = vadd.f32 %v1241, %v1329
    %v1331 = vpop.f32.mrf.mxu0
    %v1332 = vadd.f32 %v1243, %v1331
    %1333 = vmatmul.bf16.gmra.mxu0 %v685
    %v1334 = vpop.f32.mrf.mxu0
    %v1335 = vadd.f32 %v1246, %v1334
    %v1336 = vpop.f32.mrf.mxu0
    %v1337 = vadd.f32 %v1248, %v1336
    %1338 = vmatmul.bf16.gmra.mxu0 %v692
    %v1339 = vpop.f32.mrf.mxu0
    %v1340 = vadd.f32 %v1251, %v1339
    %v1341 = vpop.f32.mrf.mxu0
    %v1342 = vadd.f32 %v1253, %v1341
    %1343 = vmatmul.bf16.gmra.mxu0 %v699
    %v1344 = vpop.f32.mrf.mxu0
    %v1345 = vadd.f32 %v1256, %v1344
    %v1346 = vpop.f32.mrf.mxu0
    %v1347 = vadd.f32 %v1258, %v1346
    %1348 = vmatmul.bf16.gmra.mxu0 %v706
    %v1349 = vpop.f32.mrf.mxu0
    %v1350 = vadd.f32 %v1261, %v1349
    %v1351 = vpop.f32.mrf.mxu0
    %v1352 = vadd.f32 %v1263, %v1351
    %1353 = vmatmul.bf16.gmra.mxu0 %v713
    %v1354 = vpop.f32.mrf.mxu0
    %v1355 = vadd.f32 %v1266, %v1354
    %v1356 = vpop.f32.mrf.mxu0
    %v1357 = vadd.f32 %v1268, %v1356
    %1358 = vmatmul.bf16.gmra.mxu0 %v720
    %v1359 = vpop.f32.mrf.mxu0
    %v1360 = vadd.f32 %v1271, %v1359
    %v1361 = vpop.f32.mrf.mxu0
    %v1362 = vadd.f32 %v1273, %v1361
    %1363 = vmatmul.bf16.gmra.mxu0 %v727
    %v1364 = vpop.f32.mrf.mxu0
    %v1365 = vadd.f32 %v1276, %v1364
    %v1366 = vpop.f32.mrf.mxu0
    %v1367 = vadd.f32 %v1278, %v1366
    %1368 = vmatmul.bf16.gmra.mxu0 %v734
    %v1369 = vpop.f32.mrf.mxu0
    %v1370 = vadd.f32 %v1281, %v1369
    %v1371 = vpop.f32.mrf.mxu0
    %v1372 = vadd.f32 %v1283, %v1371
    %1373 = vmatmul.bf16.gmra.mxu0 %v741
    %v1374 = vpop.f32.mrf.mxu0
    %v1375 = vadd.f32 %v1286, %v1374
    %v1376 = vpop.f32.mrf.mxu0
    %v1377 = vadd.f32 %v1288, %v1376
    %1378 = vmatmul.bf16.gmra.mxu0 %v748
    %v1379 = vpop.f32.mrf.mxu0
    %v1380 = vadd.f32 %v1291, %v1379
    %v1381 = vpop.f32.mrf.mxu0
    %v1382 = vadd.f32 %v1293, %v1381
    %1383 = vmatmul.bf16.gmra.mxu0 %v755
    %v1384 = vpop.f32.mrf.mxu0
    %v1385 = vadd.f32 %v1296, %v1384
    %v1386 = vpop.f32.mrf.mxu0
    %v1387 = vadd.f32 %v1298, %v1386
    %1388 = vmatmul.bf16.gmra.mxu0 %v762
    %v1389 = vpop.f32.mrf.mxu0
    %v1390 = vadd.f32 %v1301, %v1389
    %v1391 = vpop.f32.mrf.mxu0
    %v1392 = vadd.f32 %v1303, %v1391
    %1393 = vdwg.mxu0
    %1394 = vmatpush.bf16.msra.mxu0 %v1127
    %1395 = vmatpush.bf16.msra.mxu0 %v1126
    %1396 = vmatpush.bf16.msra.mxu0 %v1125
    %1397 = vmatpush.bf16.msra.mxu0 %v1124
    %1398 = vmatpush.bf16.msra.mxu0 %v1123
    %1399 = vmatpush.bf16.msra.mxu0 %v1122
    %1400 = vmatpush.bf16.msra.mxu0 %v1121
    %1401 = vmatpush.bf16.msra.mxu0 %v1120
    %1402 = vmatmul.bf16.gmra.mxu0 %v658
    %v1403 = vpop.f32.mrf.mxu0
    %v1404 = vadd.f32 %v1315, %v1403
    %v1405 = vpop.f32.mrf.mxu0
    %v1406 = vadd.f32 %v1317, %v1405
    %1407 = vmatmul.bf16.gmra.mxu0 %v665
    %v1408 = vpop.f32.mrf.mxu0
    %v1409 = vadd.f32 %v1320, %v1408
    %v1410 = vpop.f32.mrf.mxu0
    %v1411 = vadd.f32 %v1322, %v1410
    %1412 = vmatmul.bf16.gmra.mxu0 %v672
    %v1413 = vpop.f32.mrf.mxu0
    %v1414 = vadd.f32 %v1325, %v1413
    %v1415 = vpop.f32.mrf.mxu0
    %v1416 = vadd.f32 %v1327, %v1415
    %1417 = vmatmul.bf16.gmra.mxu0 %v679
    %v1418 = vpop.f32.mrf.mxu0
    %v1419 = vadd.f32 %v1330, %v1418
    %v1420 = vpop.f32.mrf.mxu0
    %v1421 = vadd.f32 %v1332, %v1420
    %1422 = vmatmul.bf16.gmra.mxu0 %v686
    %v1423 = vpop.f32.mrf.mxu0
    %v1424 = vadd.f32 %v1335, %v1423
    %v1425 = vpop.f32.mrf.mxu0
    %v1426 = vadd.f32 %v1337, %v1425
    %1427 = vmatmul.bf16.gmra.mxu0 %v693
    %v1428 = vpop.f32.mrf.mxu0
    %v1429 = vadd.f32 %v1340, %v1428
    %v1430 = vpop.f32.mrf.mxu0
    %v1431 = vadd.f32 %v1342, %v1430
    %1432 = vmatmul.bf16.gmra.mxu0 %v700
    %v1433 = vpop.f32.mrf.mxu0
    %v1434 = vadd.f32 %v1345, %v1433
    %v1435 = vpop.f32.mrf.mxu0
    %v1436 = vadd.f32 %v1347, %v1435
    %1437 = vmatmul.bf16.gmra.mxu0 %v707
    %v1438 = vpop.f32.mrf.mxu0
    %v1439 = vadd.f32 %v1350, %v1438
    %v1440 = vpop.f32.mrf.mxu0
    %v1441 = vadd.f32 %v1352, %v1440
    %1442 = vmatmul.bf16.gmra.mxu0 %v714
    %v1443 = vpop.f32.mrf.mxu0
    %v1444 = vadd.f32 %v1355, %v1443
    %v1445 = vpop.f32.mrf.mxu0
    %v1446 = vadd.f32 %v1357, %v1445
    %1447 = vmatmul.bf16.gmra.mxu0 %v721
    %v1448 = vpop.f32.mrf.mxu0
    %v1449 = vadd.f32 %v1360, %v1448
    %v1450 = vpop.f32.mrf.mxu0
    %v1451 = vadd.f32 %v1362, %v1450
    %1452 = vmatmul.bf16.gmra.mxu0 %v728
    %v1453 = vpop.f32.mrf.mxu0
    %v1454 = vadd.f32 %v1365, %v1453
    %v1455 = vpop.f32.mrf.mxu0
    %v1456 = vadd.f32 %v1367, %v1455
    %1457 = vmatmul.bf16.gmra.mxu0 %v735
    %v1458 = vpop.f32.mrf.mxu0
    %v1459 = vadd.f32 %v1370, %v1458
    %v1460 = vpop.f32.mrf.mxu0
    %v1461 = vadd.f32 %v1372, %v1460
    %1462 = vmatmul.bf16.gmra.mxu0 %v742
    %v1463 = vpop.f32.mrf.mxu0
    %v1464 = vadd.f32 %v1375, %v1463
    %v1465 = vpop.f32.mrf.mxu0
    %v1466 = vadd.f32 %v1377, %v1465
    %1467 = vmatmul.bf16.gmra.mxu0 %v749
    %v1468 = vpop.f32.mrf.mxu0
    %v1469 = vadd.f32 %v1380, %v1468
    %v1470 = vpop.f32.mrf.mxu0
    %v1471 = vadd.f32 %v1382, %v1470
    %1472 = vmatmul.bf16.gmra.mxu0 %v756
    %v1473 = vpop.f32.mrf.mxu0
    %v1474 = vadd.f32 %v1385, %v1473
    %v1475 = vpop.f32.mrf.mxu0
    %v1476 = vadd.f32 %v1387, %v1475
    %1477 = vmatmul.bf16.gmra.mxu0 %v763
    %v1478 = vpop.f32.mrf.mxu0
    %v1479 = vadd.f32 %v1390, %v1478
    %v1480 = vpop.f32.mrf.mxu0
    %v1481 = vadd.f32 %v1392, %v1480
    %1482 = vdwg.mxu0
    %1483 = vmatpush.bf16.msra.mxu0 %v1135
    %1484 = vmatpush.bf16.msra.mxu0 %v1134
    %1485 = vmatpush.bf16.msra.mxu0 %v1133
    %1486 = vmatpush.bf16.msra.mxu0 %v1132
    %1487 = vmatpush.bf16.msra.mxu0 %v1131
    %1488 = vmatpush.bf16.msra.mxu0 %v1130
    %1489 = vmatpush.bf16.msra.mxu0 %v1129
    %1490 = vmatpush.bf16.msra.mxu0 %v1128
    %1491 = vmatmul.bf16.gmra.mxu0 %v659
    %v1492 = vpop.f32.mrf.mxu0
    %v1493 = vadd.f32 %v1404, %v1492
    %v1494 = vpop.f32.mrf.mxu0
    %v1495 = vadd.f32 %v1406, %v1494
    %1496 = vmatmul.bf16.gmra.mxu0 %v666
    %v1497 = vpop.f32.mrf.mxu0
    %v1498 = vadd.f32 %v1409, %v1497
    %v1499 = vpop.f32.mrf.mxu0
    %v1500 = vadd.f32 %v1411, %v1499
    %1501 = vmatmul.bf16.gmra.mxu0 %v673
    %v1502 = vpop.f32.mrf.mxu0
    %v1503 = vadd.f32 %v1414, %v1502
    %v1504 = vpop.f32.mrf.mxu0
    %v1505 = vadd.f32 %v1416, %v1504
    %1506 = vmatmul.bf16.gmra.mxu0 %v680
    %v1507 = vpop.f32.mrf.mxu0
    %v1508 = vadd.f32 %v1419, %v1507
    %v1509 = vpop.f32.mrf.mxu0
    %v1510 = vadd.f32 %v1421, %v1509
    %1511 = vmatmul.bf16.gmra.mxu0 %v687
    %v1512 = vpop.f32.mrf.mxu0
    %v1513 = vadd.f32 %v1424, %v1512
    %v1514 = vpop.f32.mrf.mxu0
    %v1515 = vadd.f32 %v1426, %v1514
    %1516 = vmatmul.bf16.gmra.mxu0 %v694
    %v1517 = vpop.f32.mrf.mxu0
    %v1518 = vadd.f32 %v1429, %v1517
    %v1519 = vpop.f32.mrf.mxu0
    %v1520 = vadd.f32 %v1431, %v1519
    %1521 = vmatmul.bf16.gmra.mxu0 %v701
    %v1522 = vpop.f32.mrf.mxu0
    %v1523 = vadd.f32 %v1434, %v1522
    %v1524 = vpop.f32.mrf.mxu0
    %v1525 = vadd.f32 %v1436, %v1524
    %1526 = vmatmul.bf16.gmra.mxu0 %v708
    %v1527 = vpop.f32.mrf.mxu0
    %v1528 = vadd.f32 %v1439, %v1527
    %v1529 = vpop.f32.mrf.mxu0
    %v1530 = vadd.f32 %v1441, %v1529
    %1531 = vmatmul.bf16.gmra.mxu0 %v715
    %v1532 = vpop.f32.mrf.mxu0
    %v1533 = vadd.f32 %v1444, %v1532
    %v1534 = vpop.f32.mrf.mxu0
    %v1535 = vadd.f32 %v1446, %v1534
    %1536 = vmatmul.bf16.gmra.mxu0 %v722
    %v1537 = vpop.f32.mrf.mxu0
    %v1538 = vadd.f32 %v1449, %v1537
    %v1539 = vpop.f32.mrf.mxu0
    %v1540 = vadd.f32 %v1451, %v1539
    %1541 = vmatmul.bf16.gmra.mxu0 %v729
    %v1542 = vpop.f32.mrf.mxu0
    %v1543 = vadd.f32 %v1454, %v1542
    %v1544 = vpop.f32.mrf.mxu0
    %v1545 = vadd.f32 %v1456, %v1544
    %1546 = vmatmul.bf16.gmra.mxu0 %v736
    %v1547 = vpop.f32.mrf.mxu0
    %v1548 = vadd.f32 %v1459, %v1547
    %v1549 = vpop.f32.mrf.mxu0
    %v1550 = vadd.f32 %v1461, %v1549
    %1551 = vmatmul.bf16.gmra.mxu0 %v743
    %v1552 = vpop.f32.mrf.mxu0
    %v1553 = vadd.f32 %v1464, %v1552
    %v1554 = vpop.f32.mrf.mxu0
    %v1555 = vadd.f32 %v1466, %v1554
    %1556 = vmatmul.bf16.gmra.mxu0 %v750
    %v1557 = vpop.f32.mrf.mxu0
    %v1558 = vadd.f32 %v1469, %v1557
    %v1559 = vpop.f32.mrf.mxu0
    %v1560 = vadd.f32 %v1471, %v1559
    %1561 = vmatmul.bf16.gmra.mxu0 %v757
    %v1562 = vpop.f32.mrf.mxu0
    %v1563 = vadd.f32 %v1474, %v1562
    %v1564 = vpop.f32.mrf.mxu0
    %v1565 = vadd.f32 %v1476, %v1564
    %1566 = vmatmul.bf16.gmra.mxu0 %v764
    %v1567 = vpop.f32.mrf.mxu0
    %v1568 = vadd.f32 %v1479, %v1567
    %v1569 = vpop.f32.mrf.mxu0
    %v1570 = vadd.f32 %v1481, %v1569
    %1571 = vdwg.mxu0
    %1572 = vmatpush.bf16.msra.mxu0 %v1143
    %1573 = vmatpush.bf16.msra.mxu0 %v1142
    %1574 = vmatpush.bf16.msra.mxu0 %v1141
    %1575 = vmatpush.bf16.msra.mxu0 %v1140
    %1576 = vmatpush.bf16.msra.mxu0 %v1139
    %1577 = vmatpush.bf16.msra.mxu0 %v1138
    %1578 = vmatpush.bf16.msra.mxu0 %v1137
    %1579 = vmatpush.bf16.msra.mxu0 %v1136
    %1580 = vmatmul.bf16.gmra.mxu0 %v660
    %v1581 = vpop.f32.mrf.mxu0
    %v1582 = vadd.f32 %v1493, %v1581
    %v1583 = vpop.f32.mrf.mxu0
    %v1584 = vadd.f32 %v1495, %v1583
    %1585 = vmatmul.bf16.gmra.mxu0 %v667
    %v1586 = vpop.f32.mrf.mxu0
    %v1587 = vadd.f32 %v1498, %v1586
    %v1588 = vpop.f32.mrf.mxu0
    %v1589 = vadd.f32 %v1500, %v1588
    %1590 = vmatmul.bf16.gmra.mxu0 %v674
    %v1591 = vpop.f32.mrf.mxu0
    %v1592 = vadd.f32 %v1503, %v1591
    %v1593 = vpop.f32.mrf.mxu0
    %v1594 = vadd.f32 %v1505, %v1593
    %1595 = vmatmul.bf16.gmra.mxu0 %v681
    %v1596 = vpop.f32.mrf.mxu0
    %v1597 = vadd.f32 %v1508, %v1596
    %v1598 = vpop.f32.mrf.mxu0
    %v1599 = vadd.f32 %v1510, %v1598
    %1600 = vmatmul.bf16.gmra.mxu0 %v688
    %v1601 = vpop.f32.mrf.mxu0
    %v1602 = vadd.f32 %v1513, %v1601
    %v1603 = vpop.f32.mrf.mxu0
    %v1604 = vadd.f32 %v1515, %v1603
    %1605 = vmatmul.bf16.gmra.mxu0 %v695
    %v1606 = vpop.f32.mrf.mxu0
    %v1607 = vadd.f32 %v1518, %v1606
    %v1608 = vpop.f32.mrf.mxu0
    %v1609 = vadd.f32 %v1520, %v1608
    %1610 = vmatmul.bf16.gmra.mxu0 %v702
    %v1611 = vpop.f32.mrf.mxu0
    %v1612 = vadd.f32 %v1523, %v1611
    %v1613 = vpop.f32.mrf.mxu0
    %v1614 = vadd.f32 %v1525, %v1613
    %1615 = vmatmul.bf16.gmra.mxu0 %v709
    %v1616 = vpop.f32.mrf.mxu0
    %v1617 = vadd.f32 %v1528, %v1616
    %v1618 = vpop.f32.mrf.mxu0
    %v1619 = vadd.f32 %v1530, %v1618
    %1620 = vmatmul.bf16.gmra.mxu0 %v716
    %v1621 = vpop.f32.mrf.mxu0
    %v1622 = vadd.f32 %v1533, %v1621
    %v1623 = vpop.f32.mrf.mxu0
    %v1624 = vadd.f32 %v1535, %v1623
    %1625 = vmatmul.bf16.gmra.mxu0 %v723
    %v1626 = vpop.f32.mrf.mxu0
    %v1627 = vadd.f32 %v1538, %v1626
    %v1628 = vpop.f32.mrf.mxu0
    %v1629 = vadd.f32 %v1540, %v1628
    %1630 = vmatmul.bf16.gmra.mxu0 %v730
    %v1631 = vpop.f32.mrf.mxu0
    %v1632 = vadd.f32 %v1543, %v1631
    %v1633 = vpop.f32.mrf.mxu0
    %v1634 = vadd.f32 %v1545, %v1633
    %1635 = vmatmul.bf16.gmra.mxu0 %v737
    %v1636 = vpop.f32.mrf.mxu0
    %v1637 = vadd.f32 %v1548, %v1636
    %v1638 = vpop.f32.mrf.mxu0
    %v1639 = vadd.f32 %v1550, %v1638
    %1640 = vmatmul.bf16.gmra.mxu0 %v744
    %v1641 = vpop.f32.mrf.mxu0
    %v1642 = vadd.f32 %v1553, %v1641
    %v1643 = vpop.f32.mrf.mxu0
    %v1644 = vadd.f32 %v1555, %v1643
    %1645 = vmatmul.bf16.gmra.mxu0 %v751
    %v1646 = vpop.f32.mrf.mxu0
    %v1647 = vadd.f32 %v1558, %v1646
    %v1648 = vpop.f32.mrf.mxu0
    %v1649 = vadd.f32 %v1560, %v1648
    %1650 = vmatmul.bf16.gmra.mxu0 %v758
    %v1651 = vpop.f32.mrf.mxu0
    %v1652 = vadd.f32 %v1563, %v1651
    %v1653 = vpop.f32.mrf.mxu0
    %v1654 = vadd.f32 %v1565, %v1653
    %1655 = vmatmul.bf16.gmra.mxu0 %v765
    %v1656 = vpop.f32.mrf.mxu0
    %v1657 = vadd.f32 %v1568, %v1656
    %v1658 = vpop.f32.mrf.mxu0
    %v1659 = vadd.f32 %v1570, %v1658
    %1660 = vdwg.mxu0
    %1661 = vmatpush.bf16.msra.mxu0 %v1151
    %1662 = vmatpush.bf16.msra.mxu0 %v1150
    %1663 = vmatpush.bf16.msra.mxu0 %v1149
    %1664 = vmatpush.bf16.msra.mxu0 %v1148
    %1665 = vmatpush.bf16.msra.mxu0 %v1147
    %1666 = vmatpush.bf16.msra.mxu0 %v1146
    %1667 = vmatpush.bf16.msra.mxu0 %v1145
    %1668 = vmatpush.bf16.msra.mxu0 %v1144
    %1669 = vmatmul.bf16.gmra.mxu0 %v661
    %v1670 = vpop.f32.mrf.mxu0
    %v1671 = vadd.f32 %v1582, %v1670
    %v1672 = vpop.f32.mrf.mxu0
    %v1673 = vadd.f32 %v1584, %v1672
    %1674 = vmatmul.bf16.gmra.mxu0 %v668
    %v1675 = vpop.f32.mrf.mxu0
    %v1676 = vadd.f32 %v1587, %v1675
    %v1677 = vpop.f32.mrf.mxu0
    %v1678 = vadd.f32 %v1589, %v1677
    %1679 = vmatmul.bf16.gmra.mxu0 %v675
    %v1680 = vpop.f32.mrf.mxu0
    %v1681 = vadd.f32 %v1592, %v1680
    %v1682 = vpop.f32.mrf.mxu0
    %v1683 = vadd.f32 %v1594, %v1682
    %1684 = vmatmul.bf16.gmra.mxu0 %v682
    %v1685 = vpop.f32.mrf.mxu0
    %v1686 = vadd.f32 %v1597, %v1685
    %v1687 = vpop.f32.mrf.mxu0
    %v1688 = vadd.f32 %v1599, %v1687
    %1689 = vmatmul.bf16.gmra.mxu0 %v689
    %v1690 = vpop.f32.mrf.mxu0
    %v1691 = vadd.f32 %v1602, %v1690
    %v1692 = vpop.f32.mrf.mxu0
    %v1693 = vadd.f32 %v1604, %v1692
    %1694 = vmatmul.bf16.gmra.mxu0 %v696
    %v1695 = vpop.f32.mrf.mxu0
    %v1696 = vadd.f32 %v1607, %v1695
    %v1697 = vpop.f32.mrf.mxu0
    %v1698 = vadd.f32 %v1609, %v1697
    %1699 = vmatmul.bf16.gmra.mxu0 %v703
    %v1700 = vpop.f32.mrf.mxu0
    %v1701 = vadd.f32 %v1612, %v1700
    %v1702 = vpop.f32.mrf.mxu0
    %v1703 = vadd.f32 %v1614, %v1702
    %1704 = vmatmul.bf16.gmra.mxu0 %v710
    %v1705 = vpop.f32.mrf.mxu0
    %v1706 = vadd.f32 %v1617, %v1705
    %v1707 = vpop.f32.mrf.mxu0
    %v1708 = vadd.f32 %v1619, %v1707
    %1709 = vmatmul.bf16.gmra.mxu0 %v717
    %v1710 = vpop.f32.mrf.mxu0
    %v1711 = vadd.f32 %v1622, %v1710
    %v1712 = vpop.f32.mrf.mxu0
    %v1713 = vadd.f32 %v1624, %v1712
    %1714 = vmatmul.bf16.gmra.mxu0 %v724
    %v1715 = vpop.f32.mrf.mxu0
    %v1716 = vadd.f32 %v1627, %v1715
    %v1717 = vpop.f32.mrf.mxu0
    %v1718 = vadd.f32 %v1629, %v1717
    %1719 = vmatmul.bf16.gmra.mxu0 %v731
    %v1720 = vpop.f32.mrf.mxu0
    %v1721 = vadd.f32 %v1632, %v1720
    %v1722 = vpop.f32.mrf.mxu0
    %v1723 = vadd.f32 %v1634, %v1722
    %1724 = vmatmul.bf16.gmra.mxu0 %v738
    %v1725 = vpop.f32.mrf.mxu0
    %v1726 = vadd.f32 %v1637, %v1725
    %v1727 = vpop.f32.mrf.mxu0
    %v1728 = vadd.f32 %v1639, %v1727
    %1729 = vmatmul.bf16.gmra.mxu0 %v745
    %v1730 = vpop.f32.mrf.mxu0
    %v1731 = vadd.f32 %v1642, %v1730
    %v1732 = vpop.f32.mrf.mxu0
    %v1733 = vadd.f32 %v1644, %v1732
    %1734 = vmatmul.bf16.gmra.mxu0 %v752
    %v1735 = vpop.f32.mrf.mxu0
    %v1736 = vadd.f32 %v1647, %v1735
    %v1737 = vpop.f32.mrf.mxu0
    %v1738 = vadd.f32 %v1649, %v1737
    %1739 = vmatmul.bf16.gmra.mxu0 %v759
    %v1740 = vpop.f32.mrf.mxu0
    %v1741 = vadd.f32 %v1652, %v1740
    %v1742 = vpop.f32.mrf.mxu0
    %v1743 = vadd.f32 %v1654, %v1742
    %1744 = vmatmul.bf16.gmra.mxu0 %v766
    %v1745 = vpop.f32.mrf.mxu0
    %v1746 = vadd.f32 %v1657, %v1745
    %v1747 = vpop.f32.mrf.mxu0
    %v1748 = vadd.f32 %v1659, %v1747
    %1749 = vdwg.mxu0
    %1750 = vmatpush.bf16.msra.mxu0 %v1159
    %1751 = vmatpush.bf16.msra.mxu0 %v1158
    %1752 = vmatpush.bf16.msra.mxu0 %v1157
    %1753 = vmatpush.bf16.msra.mxu0 %v1156
    %1754 = vmatpush.bf16.msra.mxu0 %v1155
    %1755 = vmatpush.bf16.msra.mxu0 %v1154
    %1756 = vmatpush.bf16.msra.mxu0 %v1153
    %1757 = vmatpush.bf16.msra.mxu0 %v1152
    %1758 = vmatmul.bf16.gmra.mxu0 %v662
    %v1759 = vpop.f32.mrf.mxu0
    %v1760 = vadd.f32 %v1671, %v1759
    %v1761 = vpop.f32.mrf.mxu0
    %v1762 = vadd.f32 %v1673, %v1761
    %1763 = vmatmul.bf16.gmra.mxu0 %v669
    %v1764 = vpop.f32.mrf.mxu0
    %v1765 = vadd.f32 %v1676, %v1764
    %v1766 = vpop.f32.mrf.mxu0
    %v1767 = vadd.f32 %v1678, %v1766
    %1768 = vmatmul.bf16.gmra.mxu0 %v676
    %v1769 = vpop.f32.mrf.mxu0
    %v1770 = vadd.f32 %v1681, %v1769
    %v1771 = vpop.f32.mrf.mxu0
    %v1772 = vadd.f32 %v1683, %v1771
    %1773 = vmatmul.bf16.gmra.mxu0 %v683
    %v1774 = vpop.f32.mrf.mxu0
    %v1775 = vadd.f32 %v1686, %v1774
    %v1776 = vpop.f32.mrf.mxu0
    %v1777 = vadd.f32 %v1688, %v1776
    %1778 = vmatmul.bf16.gmra.mxu0 %v690
    %v1779 = vpop.f32.mrf.mxu0
    %v1780 = vadd.f32 %v1691, %v1779
    %v1781 = vpop.f32.mrf.mxu0
    %v1782 = vadd.f32 %v1693, %v1781
    %1783 = vmatmul.bf16.gmra.mxu0 %v697
    %v1784 = vpop.f32.mrf.mxu0
    %v1785 = vadd.f32 %v1696, %v1784
    %v1786 = vpop.f32.mrf.mxu0
    %v1787 = vadd.f32 %v1698, %v1786
    %1788 = vmatmul.bf16.gmra.mxu0 %v704
    %v1789 = vpop.f32.mrf.mxu0
    %v1790 = vadd.f32 %v1701, %v1789
    %v1791 = vpop.f32.mrf.mxu0
    %v1792 = vadd.f32 %v1703, %v1791
    %1793 = vmatmul.bf16.gmra.mxu0 %v711
    %v1794 = vpop.f32.mrf.mxu0
    %v1795 = vadd.f32 %v1706, %v1794
    %v1796 = vpop.f32.mrf.mxu0
    %v1797 = vadd.f32 %v1708, %v1796
    %1798 = vmatmul.bf16.gmra.mxu0 %v718
    %v1799 = vpop.f32.mrf.mxu0
    %v1800 = vadd.f32 %v1711, %v1799
    %v1801 = vpop.f32.mrf.mxu0
    %v1802 = vadd.f32 %v1713, %v1801
    %1803 = vmatmul.bf16.gmra.mxu0 %v725
    %v1804 = vpop.f32.mrf.mxu0
    %v1805 = vadd.f32 %v1716, %v1804
    %v1806 = vpop.f32.mrf.mxu0
    %v1807 = vadd.f32 %v1718, %v1806
    %1808 = vmatmul.bf16.gmra.mxu0 %v732
    %v1809 = vpop.f32.mrf.mxu0
    %v1810 = vadd.f32 %v1721, %v1809
    %v1811 = vpop.f32.mrf.mxu0
    %v1812 = vadd.f32 %v1723, %v1811
    %1813 = vmatmul.bf16.gmra.mxu0 %v739
    %v1814 = vpop.f32.mrf.mxu0
    %v1815 = vadd.f32 %v1726, %v1814
    %v1816 = vpop.f32.mrf.mxu0
    %v1817 = vadd.f32 %v1728, %v1816
    %1818 = vmatmul.bf16.gmra.mxu0 %v746
    %v1819 = vpop.f32.mrf.mxu0
    %v1820 = vadd.f32 %v1731, %v1819
    %v1821 = vpop.f32.mrf.mxu0
    %v1822 = vadd.f32 %v1733, %v1821
    %1823 = vmatmul.bf16.gmra.mxu0 %v753
    %v1824 = vpop.f32.mrf.mxu0
    %v1825 = vadd.f32 %v1736, %v1824
    %v1826 = vpop.f32.mrf.mxu0
    %v1827 = vadd.f32 %v1738, %v1826
    %1828 = vmatmul.bf16.gmra.mxu0 %v760
    %v1829 = vpop.f32.mrf.mxu0
    %v1830 = vadd.f32 %v1741, %v1829
    %v1831 = vpop.f32.mrf.mxu0
    %v1832 = vadd.f32 %v1743, %v1831
    %1833 = vmatmul.bf16.gmra.mxu0 %v767
    %v1834 = vpop.f32.mrf.mxu0
    %v1835 = vadd.f32 %v1746, %v1834
    %v1836 = vpop.f32.mrf.mxu0
    %v1837 = vadd.f32 %v1748, %v1836
    %1838 = vdwg.mxu0
    %v1839 = vmax.f32 %v1760, 0.0
    %v1840 = vmax.f32 %v1762, 0.0
    %v1841 = vmax.f32 %v1765, 0.0
    %v1842 = vmax.f32 %v1767, 0.0
    %v1843 = vmax.f32 %v1770, 0.0
    %v1844 = vmax.f32 %v1772, 0.0
    %v1845 = vmax.f32 %v1775, 0.0
    %v1846 = vmax.f32 %v1777, 0.0
    %v1847 = vmax.f32 %v1780, 0.0
    %v1848 = vmax.f32 %v1782, 0.0
    %v1849 = vmax.f32 %v1785, 0.0
    %v1850 = vmax.f32 %v1787, 0.0
    %v1851 = vmax.f32 %v1790, 0.0
    %v1852 = vmax.f32 %v1792, 0.0
    %v1853 = vmax.f32 %v1795, 0.0
    %v1854 = vmax.f32 %v1797, 0.0
    %v1855 = vmax.f32 %v1800, 0.0
    %v1856 = vmax.f32 %v1802, 0.0
    %v1857 = vmax.f32 %v1805, 0.0
    %v1858 = vmax.f32 %v1807, 0.0
    %v1859 = vmax.f32 %v1810, 0.0
    %v1860 = vmax.f32 %v1812, 0.0
    %v1861 = vmax.f32 %v1815, 0.0
    %v1862 = vmax.f32 %v1817, 0.0
    %v1863 = vmax.f32 %v1820, 0.0
    %v1864 = vmax.f32 %v1822, 0.0
    %v1865 = vmax.f32 %v1825, 0.0
    %v1866 = vmax.f32 %v1827, 0.0
    %v1867 = vmax.f32 %v1830, 0.0
    %v1868 = vmax.f32 %v1832, 0.0
    %v1869 = vmax.f32 %v1835, 0.0
    %v1870 = vmax.f32 %v1837, 0.0
    %v1871 = vpack.c.bf16 %v1840, %v1839
    %v1872 = vpack.c.bf16 %v1842, %v1841
    %v1873 = vpack.c.bf16 %v1844, %v1843
    %v1874 = vpack.c.bf16 %v1846, %v1845
    %v1875 = vpack.c.bf16 %v1848, %v1847
    %v1876 = vpack.c.bf16 %v1850, %v1849
    %v1877 = vpack.c.bf16 %v1852, %v1851
    %v1878 = vpack.c.bf16 %v1854, %v1853
    %v1879 = vpack.c.bf16 %v1856, %v1855
    %v1880 = vpack.c.bf16 %v1858, %v1857
    %v1881 = vpack.c.bf16 %v1860, %v1859
    %v1882 = vpack.c.bf16 %v1862, %v1861
    %v1883 = vpack.c.bf16 %v1864, %v1863
    %v1884 = vpack.c.bf16 %v1866, %v1865
    %v1885 = vpack.c.bf16 %v1868, %v1867
    %v1886 = vpack.c.bf16 %v1870, %v1869
    %v1887 = vld [vmem:[%s3] sm:$0xf]
    %v1888 = vld [vmem:[%s3 + $0x4] sm:$0xf]
    %v1889 = vld [vmem:[%s3 + $0x8] sm:$0xf]
    %v1890 = vld [vmem:[%s3 + $0xc] sm:$0xf]
    %v1891 = vld [vmem:[%s3 + $0x10] sm:$0xf]
    %v1892 = vld [vmem:[%s3 + $0x14] sm:$0xf]
    %v1893 = vld [vmem:[%s3 + $0x18] sm:$0xf]
    %v1894 = vld [vmem:[%s3 + $0x1c] sm:$0xf]
    %v1895 = vld [vmem:[%s3 + $0x20] sm:$0xf]
    %v1896 = vld [vmem:[%s3 + $0x24] sm:$0xf]
    %v1897 = vld [vmem:[%s3 + $0x28] sm:$0xf]
    %v1898 = vld [vmem:[%s3 + $0x2c] sm:$0xf]
    %v1899 = vld [vmem:[%s3 + $0x30] sm:$0xf]
    %v1900 = vld [vmem:[%s3 + $0x34] sm:$0xf]
    %v1901 = vld [vmem:[%s3 + $0x38] sm:$0xf]
    %v1902 = vld [vmem:[%s3 + $0x3c] sm:$0xf]
    %v1903 = vld [vmem:[%s4] sm:$0x1]
    %v1905 = vperm.slane %v1903, 0
    %v1923 = vunpack.c.l.b16 %v1887
    %v1924 = vunpack.c.l.b16 %v1888
    %v1925 = vunpack.c.l.b16 %v1889
    %v1926 = vunpack.c.l.b16 %v1890
    %v1927 = vunpack.c.l.b16 %v1891
    %v1928 = vunpack.c.l.b16 %v1892
    %v1929 = vunpack.c.l.b16 %v1893
    %v1930 = vunpack.c.l.b16 %v1894
    %v1931 = vunpack.c.l.b16 %v1895
    %v1932 = vunpack.c.l.b16 %v1896
    %v1933 = vunpack.c.l.b16 %v1897
    %v1934 = vunpack.c.l.b16 %v1898
    %v1935 = vunpack.c.l.b16 %v1899
    %v1936 = vunpack.c.l.b16 %v1900
    %v1937 = vunpack.c.l.b16 %v1901
    %v1938 = vunpack.c.l.b16 %v1902
    %v1939 = vpack.c.b16 %v1924, %v1923
    %v1940 = vpack.c.b16 %v1926, %v1925
    %v1941 = vpack.c.b16 %v1928, %v1927
    %v1942 = vpack.c.b16 %v1930, %v1929
    %v1943 = vpack.c.b16 %v1932, %v1931
    %v1944 = vpack.c.b16 %v1934, %v1933
    %v1945 = vpack.c.b16 %v1936, %v1935
    %v1946 = vpack.c.b16 %v1938, %v1937
    %1955 = vmatpush.bf16.msra.mxu0 %v1946
    %1956 = vmatpush.bf16.msra.mxu0 %v1945
    %1957 = vmatpush.bf16.msra.mxu0 %v1944
    %1958 = vmatpush.bf16.msra.mxu0 %v1943
    %1959 = vmatpush.bf16.msra.mxu0 %v1942
    %1960 = vmatpush.bf16.msra.mxu0 %v1941
    %1961 = vmatpush.bf16.msra.mxu0 %v1940
    %1962 = vmatpush.bf16.msra.mxu0 %v1939
    %1963 = vmatmul.bf16.gmra.mxu0 %v1871
    %v1964 = vpop.f32.mrf.mxu0
    %v1965 = vadd.f32 %v1905, %v1964
    %v1966 = vpop.f32.mrf.mxu0
    %v1967 = vadd.f32 %v1905, %v1966
    %1968 = vmatmul.bf16.gmra.mxu0 %v1872
    %v1969 = vpop.f32.mrf.mxu0
    %v1970 = vadd.f32 %v1905, %v1969
    %v1971 = vpop.f32.mrf.mxu0
    %v1972 = vadd.f32 %v1905, %v1971
    %1973 = vmatmul.bf16.gmra.mxu0 %v1873
    %v1974 = vpop.f32.mrf.mxu0
    %v1975 = vadd.f32 %v1905, %v1974
    %v1976 = vpop.f32.mrf.mxu0
    %v1977 = vadd.f32 %v1905, %v1976
    %1978 = vmatmul.bf16.gmra.mxu0 %v1874
    %v1979 = vpop.f32.mrf.mxu0
    %v1980 = vadd.f32 %v1905, %v1979
    %v1981 = vpop.f32.mrf.mxu0
    %v1982 = vadd.f32 %v1905, %v1981
    %1983 = vmatmul.bf16.gmra.mxu0 %v1875
    %v1984 = vpop.f32.mrf.mxu0
    %v1985 = vadd.f32 %v1905, %v1984
    %v1986 = vpop.f32.mrf.mxu0
    %v1987 = vadd.f32 %v1905, %v1986
    %1988 = vmatmul.bf16.gmra.mxu0 %v1876
    %v1989 = vpop.f32.mrf.mxu0
    %v1990 = vadd.f32 %v1905, %v1989
    %v1991 = vpop.f32.mrf.mxu0
    %v1992 = vadd.f32 %v1905, %v1991
    %1993 = vmatmul.bf16.gmra.mxu0 %v1877
    %v1994 = vpop.f32.mrf.mxu0
    %v1995 = vadd.f32 %v1905, %v1994
    %v1996 = vpop.f32.mrf.mxu0
    %v1997 = vadd.f32 %v1905, %v1996
    %1998 = vmatmul.bf16.gmra.mxu0 %v1878
    %v1999 = vpop.f32.mrf.mxu0
    %v2000 = vadd.f32 %v1905, %v1999
    %v2001 = vpop.f32.mrf.mxu0
    %v2002 = vadd.f32 %v1905, %v2001
    %2003 = vmatmul.bf16.gmra.mxu0 %v1879
    %v2004 = vpop.f32.mrf.mxu0
    %v2005 = vadd.f32 %v1905, %v2004
    %v2006 = vpop.f32.mrf.mxu0
    %v2007 = vadd.f32 %v1905, %v2006
    %2008 = vmatmul.bf16.gmra.mxu0 %v1880
    %v2009 = vpop.f32.mrf.mxu0
    %v2010 = vadd.f32 %v1905, %v2009
    %v2011 = vpop.f32.mrf.mxu0
    %v2012 = vadd.f32 %v1905, %v2011
    %2013 = vmatmul.bf16.gmra.mxu0 %v1881
    %v2014 = vpop.f32.mrf.mxu0
    %v2015 = vadd.f32 %v1905, %v2014
    %v2016 = vpop.f32.mrf.mxu0
    %v2017 = vadd.f32 %v1905, %v2016
    %2018 = vmatmul.bf16.gmra.mxu0 %v1882
    %v2019 = vpop.f32.mrf.mxu0
    %v2020 = vadd.f32 %v1905, %v2019
    %v2021 = vpop.f32.mrf.mxu0
    %v2022 = vadd.f32 %v1905, %v2021
    %2023 = vmatmul.bf16.gmra.mxu0 %v1883
    %v2024 = vpop.f32.mrf.mxu0
    %v2025 = vadd.f32 %v1905, %v2024
    %v2026 = vpop.f32.mrf.mxu0
    %v2027 = vadd.f32 %v1905, %v2026
    %2028 = vmatmul.bf16.gmra.mxu0 %v1884
    %v2029 = vpop.f32.mrf.mxu0
    %v2030 = vadd.f32 %v1905, %v2029
    %v2031 = vpop.f32.mrf.mxu0
    %v2032 = vadd.f32 %v1905, %v2031
    %2033 = vmatmul.bf16.gmra.mxu0 %v1885
    %v2034 = vpop.f32.mrf.mxu0
    %v2035 = vadd.f32 %v1905, %v2034
    %v2036 = vpop.f32.mrf.mxu0
    %v2037 = vadd.f32 %v1905, %v2036
    %2038 = vmatmul.bf16.gmra.mxu0 %v1886
    %v2039 = vpop.f32.mrf.mxu0
    %v2040 = vadd.f32 %v1905, %v2039
    %v2041 = vpop.f32.mrf.mxu0
    %v2042 = vadd.f32 %v1905, %v2041
    %2043 = vdwg.mxu0
    %v2044 = vmax.f32 %v1965, 0.0
    %v2045 = vmax.f32 %v1967, 0.0
    %v2046 = vmax.f32 %v1970, 0.0
    %v2047 = vmax.f32 %v1972, 0.0
    %v2048 = vmax.f32 %v1975, 0.0
    %v2049 = vmax.f32 %v1977, 0.0
    %v2050 = vmax.f32 %v1980, 0.0
    %v2051 = vmax.f32 %v1982, 0.0
    %v2052 = vmax.f32 %v1985, 0.0
    %v2053 = vmax.f32 %v1987, 0.0
    %v2054 = vmax.f32 %v1990, 0.0
    %v2055 = vmax.f32 %v1992, 0.0
    %v2056 = vmax.f32 %v1995, 0.0
    %v2057 = vmax.f32 %v1997, 0.0
    %v2058 = vmax.f32 %v2000, 0.0
    %v2059 = vmax.f32 %v2002, 0.0
    %v2060 = vmax.f32 %v2005, 0.0
    %v2061 = vmax.f32 %v2007, 0.0
    %v2062 = vmax.f32 %v2010, 0.0
    %v2063 = vmax.f32 %v2012, 0.0
    %v2064 = vmax.f32 %v2015, 0.0
    %v2065 = vmax.f32 %v2017, 0.0
    %v2066 = vmax.f32 %v2020, 0.0
    %v2067 = vmax.f32 %v2022, 0.0
    %v2068 = vmax.f32 %v2025, 0.0
    %v2069 = vmax.f32 %v2027, 0.0
    %v2070 = vmax.f32 %v2030, 0.0
    %v2071 = vmax.f32 %v2032, 0.0
    %v2072 = vmax.f32 %v2035, 0.0
    %v2073 = vmax.f32 %v2037, 0.0
    %v2074 = vmax.f32 %v2040, 0.0
    %v2075 = vmax.f32 %v2042, 0.0
    %v2076 = vpack.c.bf16 %v2045, %v2044
    %v2077 = vpack.c.bf16 %v2047, %v2046
    %v2078 = vpack.c.bf16 %v2049, %v2048
    %v2079 = vpack.c.bf16 %v2051, %v2050
    %v2080 = vpack.c.bf16 %v2053, %v2052
    %v2081 = vpack.c.bf16 %v2055, %v2054
    %v2082 = vpack.c.bf16 %v2057, %v2056
    %v2083 = vpack.c.bf16 %v2059, %v2058
    %v2084 = vpack.c.bf16 %v2061, %v2060
    %v2085 = vpack.c.bf16 %v2063, %v2062
    %v2086 = vpack.c.bf16 %v2065, %v2064
    %v2087 = vpack.c.bf16 %v2067, %v2066
    %v2088 = vpack.c.bf16 %v2069, %v2068
    %v2089 = vpack.c.bf16 %v2071, %v2070
    %v2090 = vpack.c.bf16 %v2073, %v2072
    %v2091 = vpack.c.bf16 %v2075, %v2074
    %v2092 = vld [vmem:[%s5] sm:$0xf]
    %v2093 = vld [vmem:[%s5 + $0x4] sm:$0xf]
    %v2094 = vld [vmem:[%s5 + $0x8] sm:$0xf]
    %v2095 = vld [vmem:[%s5 + $0xc] sm:$0xf]
    %v2096 = vld [vmem:[%s5 + $0x10] sm:$0xf]
    %v2097 = vld [vmem:[%s5 + $0x14] sm:$0xf]
    %v2098 = vld [vmem:[%s5 + $0x18] sm:$0xf]
    %v2099 = vld [vmem:[%s5 + $0x1c] sm:$0xf]
    %v2100 = vld [vmem:[%s6] sm:$0x1]
    %v2102 = vperm.slane %v2100, 0
    %v2112 = vunpack.c.l.b16 %v2092
    %v2113 = vunpack.c.l.b16 %v2093
    %v2114 = vunpack.c.l.b16 %v2094
    %v2115 = vunpack.c.l.b16 %v2095
    %v2116 = vunpack.c.l.b16 %v2096
    %v2117 = vunpack.c.l.b16 %v2097
    %v2118 = vunpack.c.l.b16 %v2098
    %v2119 = vunpack.c.l.b16 %v2099
    %v2120 = vpack.c.b16 %v2113, %v2112
    %v2121 = vpack.c.b16 %v2115, %v2114
    %v2122 = vpack.c.b16 %v2117, %v2116
    %v2123 = vpack.c.b16 %v2119, %v2118
    %vm2128 = vcmask 523264
    %v2130 = vsel %vm2128, %v2076, 0
    %v2133 = vsel %vm2128, %v2077, 0
    %v2136 = vsel %vm2128, %v2078, 0
    %v2139 = vsel %vm2128, %v2079, 0
    %v2142 = vsel %vm2128, %v2080, 0
    %v2145 = vsel %vm2128, %v2081, 0
    %v2148 = vsel %vm2128, %v2082, 0
    %v2151 = vsel %vm2128, %v2083, 0
    %v2154 = vsel %vm2128, %v2084, 0
    %v2157 = vsel %vm2128, %v2085, 0
    %v2160 = vsel %vm2128, %v2086, 0
    %v2163 = vsel %vm2128, %v2087, 0
    %v2166 = vsel %vm2128, %v2088, 0
    %v2169 = vsel %vm2128, %v2089, 0
    %v2172 = vsel %vm2128, %v2090, 0
    %v2175 = vsel %vm2128, %v2091, 0
    %2177 = vmatpush.bf16.msra.mxu0 0
    %2178 = vmatpush.bf16.msra.mxu0 0
    %2179 = vmatpush.bf16.msra.mxu0 0
    %2180 = vmatpush.bf16.msra.mxu0 0
    %2181 = vmatpush.bf16.msra.mxu0 %v2123
    %2182 = vmatpush.bf16.msra.mxu0 %v2122
    %2183 = vmatpush.bf16.msra.mxu0 %v2121
    %2184 = vmatpush.bf16.msra.mxu0 %v2120
    %2185 = vmatmul.bf16.gmra.mxu0 %v2130
    %v2186 = vpop.f32.mrf.mxu0
    %v2187 = vadd.f32 %v2102, %v2186
    %v2188 = vpop.f32.mrf.mxu0
    %v2189 = vadd.f32 %v2102, %v2188
    %2190 = vmatmul.bf16.gmra.mxu0 %v2133
    %v2191 = vpop.f32.mrf.mxu0
    %v2192 = vadd.f32 %v2102, %v2191
    %v2193 = vpop.f32.mrf.mxu0
    %v2194 = vadd.f32 %v2102, %v2193
    %2195 = vmatmul.bf16.gmra.mxu0 %v2136
    %v2196 = vpop.f32.mrf.mxu0
    %v2197 = vadd.f32 %v2102, %v2196
    %v2198 = vpop.f32.mrf.mxu0
    %v2199 = vadd.f32 %v2102, %v2198
    %2200 = vmatmul.bf16.gmra.mxu0 %v2139
    %v2201 = vpop.f32.mrf.mxu0
    %v2202 = vadd.f32 %v2102, %v2201
    %v2203 = vpop.f32.mrf.mxu0
    %v2204 = vadd.f32 %v2102, %v2203
    %2205 = vmatmul.bf16.gmra.mxu0 %v2142
    %v2206 = vpop.f32.mrf.mxu0
    %v2207 = vadd.f32 %v2102, %v2206
    %v2208 = vpop.f32.mrf.mxu0
    %v2209 = vadd.f32 %v2102, %v2208
    %2210 = vmatmul.bf16.gmra.mxu0 %v2145
    %v2211 = vpop.f32.mrf.mxu0
    %v2212 = vadd.f32 %v2102, %v2211
    %v2213 = vpop.f32.mrf.mxu0
    %v2214 = vadd.f32 %v2102, %v2213
    %2215 = vmatmul.bf16.gmra.mxu0 %v2148
    %v2216 = vpop.f32.mrf.mxu0
    %v2217 = vadd.f32 %v2102, %v2216
    %v2218 = vpop.f32.mrf.mxu0
    %v2219 = vadd.f32 %v2102, %v2218
    %2220 = vmatmul.bf16.gmra.mxu0 %v2151
    %v2221 = vpop.f32.mrf.mxu0
    %v2222 = vadd.f32 %v2102, %v2221
    %v2223 = vpop.f32.mrf.mxu0
    %v2224 = vadd.f32 %v2102, %v2223
    %2225 = vmatmul.bf16.gmra.mxu0 %v2154
    %v2226 = vpop.f32.mrf.mxu0
    %v2227 = vadd.f32 %v2102, %v2226
    %v2228 = vpop.f32.mrf.mxu0
    %v2229 = vadd.f32 %v2102, %v2228
    %2230 = vmatmul.bf16.gmra.mxu0 %v2157
    %v2231 = vpop.f32.mrf.mxu0
    %v2232 = vadd.f32 %v2102, %v2231
    %v2233 = vpop.f32.mrf.mxu0
    %v2234 = vadd.f32 %v2102, %v2233
    %2235 = vmatmul.bf16.gmra.mxu0 %v2160
    %v2236 = vpop.f32.mrf.mxu0
    %v2237 = vadd.f32 %v2102, %v2236
    %v2238 = vpop.f32.mrf.mxu0
    %v2239 = vadd.f32 %v2102, %v2238
    %2240 = vmatmul.bf16.gmra.mxu0 %v2163
    %v2241 = vpop.f32.mrf.mxu0
    %v2242 = vadd.f32 %v2102, %v2241
    %v2243 = vpop.f32.mrf.mxu0
    %v2244 = vadd.f32 %v2102, %v2243
    %2245 = vmatmul.bf16.gmra.mxu0 %v2166
    %v2246 = vpop.f32.mrf.mxu0
    %v2247 = vadd.f32 %v2102, %v2246
    %v2248 = vpop.f32.mrf.mxu0
    %v2249 = vadd.f32 %v2102, %v2248
    %2250 = vmatmul.bf16.gmra.mxu0 %v2169
    %v2251 = vpop.f32.mrf.mxu0
    %v2252 = vadd.f32 %v2102, %v2251
    %v2253 = vpop.f32.mrf.mxu0
    %v2254 = vadd.f32 %v2102, %v2253
    %2255 = vmatmul.bf16.gmra.mxu0 %v2172
    %v2256 = vpop.f32.mrf.mxu0
    %v2257 = vadd.f32 %v2102, %v2256
    %v2258 = vpop.f32.mrf.mxu0
    %v2259 = vadd.f32 %v2102, %v2258
    %2260 = vmatmul.bf16.gmra.mxu0 %v2175
    %v2261 = vpop.f32.mrf.mxu0
    %v2262 = vadd.f32 %v2102, %v2261
    %v2263 = vpop.f32.mrf.mxu0
    %v2264 = vadd.f32 %v2102, %v2263
    %2265 = vdwg.mxu0
    %2266 = vst [vmem:[#allocation7] sm:$0xff] %v2187
    %2267 = vst [vmem:[#allocation7 + $0x8] sm:$0xff] %v2189
    %2268 = vst [vmem:[#allocation7 + $0x10] sm:$0xff] %v2192
    %2269 = vst [vmem:[#allocation7 + $0x18] sm:$0xff] %v2194
    %2270 = vst [vmem:[#allocation7 + $0x20] sm:$0xff] %v2197
    %2271 = vst [vmem:[#allocation7 + $0x28] sm:$0xff] %v2199
    %2272 = vst [vmem:[#allocation7 + $0x30] sm:$0xff] %v2202
    %2273 = vst [vmem:[#allocation7 + $0x38] sm:$0xff] %v2204
    %2274 = vst [vmem:[#allocation7 + $0x40] sm:$0xff] %v2207
    %2275 = vst [vmem:[#allocation7 + $0x48] sm:$0xff] %v2209
    %2276 = vst [vmem:[#allocation7 + $0x50] sm:$0xff] %v2212
    %2277 = vst [vmem:[#allocation7 + $0x58] sm:$0xff] %v2214
    %2278 = vst [vmem:[#allocation7 + $0x60] sm:$0xff] %v2217
    %2279 = vst [vmem:[#allocation7 + $0x68] sm:$0xff] %v2219
    %2280 = vst [vmem:[#allocation7 + $0x70] sm:$0xff] %v2222
    %2281 = vst [vmem:[#allocation7 + $0x78] sm:$0xff] %v2224
    %2282 = vst [vmem:[#allocation7 + $0x80] sm:$0xff] %v2227
    %2283 = vst [vmem:[#allocation7 + $0x88] sm:$0xff] %v2229
    %2284 = vst [vmem:[#allocation7 + $0x90] sm:$0xff] %v2232
    %2285 = vst [vmem:[#allocation7 + $0x98] sm:$0xff] %v2234
    %2286 = vst [vmem:[#allocation7 + $0xa0] sm:$0xff] %v2237
    %2287 = vst [vmem:[#allocation7 + $0xa8] sm:$0xff] %v2239
    %2288 = vst [vmem:[#allocation7 + $0xb0] sm:$0xff] %v2242
    %2289 = vst [vmem:[#allocation7 + $0xb8] sm:$0xff] %v2244
    %2290 = vst [vmem:[#allocation7 + $0xc0] sm:$0xff] %v2247
    %2291 = vst [vmem:[#allocation7 + $0xc8] sm:$0xff] %v2249
    %2292 = vst [vmem:[#allocation7 + $0xd0] sm:$0xff] %v2252
    %2293 = vst [vmem:[#allocation7 + $0xd8] sm:$0xff] %v2254
    %2294 = vst [vmem:[#allocation7 + $0xe0] sm:$0xff] %v2257
    %2295 = vst [vmem:[#allocation7 + $0xe8] sm:$0xff] %v2259
    %2296 = vst [vmem:[#allocation7 + $0xf0] sm:$0xff] %v2262
    %2297 = vst [vmem:[#allocation7 + $0xf8] sm:$0xff] %v2264
    // Predicated region
    $region38: #{tpu_custom_call.1} parent=1 // pred_check
      _
    $region39: #{tpu_custom_call.1} parent=1 // pred_check_branch
      %2299 = sbr.rel (0) target = $region41
    $region40: #{tpu_custom_call.1} parent=1 // pred_region
      %2301 = vsyncadd [#allocation4], 0
      %s2302 = sshll.u32 [#allocation7], 4
      %s2303 = int_to_ptr.vmem [resolvable:$true] %s2302
      %s2304 = sshll.u32 %s7, 4
      %s2305 = int_to_ptr.hbm [resolvable:$true] %s2304
      %2310 = dma.vmem_to_hbm [thread:$0]  %s2303, 4096, %s2305, [#allocation4], 128, 128, 8
    $region41: #{tpu_custom_call.1} parent=1 // pred_fallthru
      _
    // Predicated region
    $region42: #{tpu_custom_call.1} parent=1 // pred_check
      _
    $region43: #{tpu_custom_call.1} parent=1 // pred_check_branch
      %2312 = sbr.rel (0) target = $region45
    $region44: #{tpu_custom_call.1} parent=1 // pred_region
      %2314 = dma.done [#allocation4], 4096
    $region45: #{tpu_custom_call.1} parent=1 // pred_fallthru
      _
    %2315 = vsyncpa [#allocation3], 1
    %2316 = vsyncpa [#allocation6], 1
    %2317 = vsyncpa [#allocation4], 1

</llo_original>
